<compile_context>
chip_gen: v7x
topology: tpu7x:2x2x1
jax: 0.10.0
libtpu: 0.0.40
codegen_flags: <defaults>
</compile_context>

<pallas_src>
import functools

import jax
import jax.numpy as jnp
from jax.experimental import pallas as pl
from jax.experimental.pallas import tpu as pltpu


def _cross_attn_kernel(tgt_ref, mem_ref, qpos_ref, pos_ref,
                       wq_ref, wk_ref, wv_ref, wo_ref,
                       bq_ref, bk_ref, bv_ref, bo_ref,
                       lnw_ref, lnb_ref,
                       out_ref,
                       kh_ref, vh_ref,
                       *, nhead: int, cache_kv: bool, ln_eps: float = 1e-5):
    f32 = jnp.float32
    bf16 = jnp.bfloat16

    Lm = mem_ref.shape[1]
    D = mem_ref.shape[2]
    hd = D // nhead

    def split_heads(x_f32, L):
        # (L, D) f32 -> (H, L, hd) bf16 via one reshape + layout-aware transpose.
        return pltpu.einshape('lhd->hld', x_f32.astype(bf16).reshape(L, nhead, hd))

    def project_kv():
        mem = mem_ref[0]                                          # (Lm, D) bf16
        k_in = mem + pos_ref[0]                                   # bf16 add
        k = jnp.dot(k_in, wk_ref[...], preferred_element_type=f32) + bk_ref[0]
        v = jnp.dot(mem, wv_ref[...], preferred_element_type=f32) + bv_ref[0]
        return split_heads(k, Lm), split_heads(v, Lm)

    if cache_kv:
        # Compute K/V once per batch element (q axis is 'arbitrary').
        @pl.when(pl.program_id(1) == 0)
        def _():
            kh_c, vh_c = project_kv()
            kh_ref[...] = kh_c
            vh_ref[...] = vh_c
        kh = kh_ref[...]
        vh = vh_ref[...]
    else:
        kh, vh = project_kv()

    # ---- Q projection (per q tile) ------------------------------------------
    tgt = tgt_ref[0]                                              # (TQ, D) f32
    TQ = tgt.shape[0]
    q_in = tgt.astype(bf16) + qpos_ref[0]                         # bf16 add
    # 1/sqrt(head_dim) already folded into wq / bq at trace time.
    q = jnp.dot(q_in, wq_ref[...], preferred_element_type=f32) + bq_ref[0]
    qh = split_heads(q, TQ)                                       # (H, TQ, hd)

    # ---- Attention (full-Lm softmax, normalize after PV matmul) -------------
    s = jnp.einsum('hqd,hkd->hqk', qh, kh,
                   preferred_element_type=f32)                    # (H, TQ, Lm)
    s = s - jnp.max(s, axis=-1, keepdims=True)
    p = jnp.exp(s)
    l = jnp.sum(p, axis=-1, keepdims=True)                        # (H, TQ, 1)
    ctx = jnp.einsum('hqk,hkd->hqd', p.astype(bf16), vh,
                     preferred_element_type=f32)                  # (H, TQ, hd)
    ctx = (ctx * pl.reciprocal(l, approx=True)).astype(bf16)      # normalize post-PV

    # ---- Output projection: MXU-accumulated head reduction ------------------
    attn = jnp.dot(ctx[0], wo_ref[0], preferred_element_type=f32)
    for h in range(1, nhead):
        attn = attn + jnp.dot(ctx[h], wo_ref[h], preferred_element_type=f32)
    attn = attn + bo_ref[0]                                       # (TQ, D) f32

    # ---- Residual + post-LayerNorm in f32 ------------------------------------
    x = tgt.astype(f32) + attn
    mu = jnp.mean(x, axis=-1, keepdims=True)
    xc = x - mu
    var = jnp.mean(xc * xc, axis=-1, keepdims=True)
    inv = jax.lax.rsqrt(var + ln_eps)
    out_ref[0] = (xc * (inv * lnw_ref[0]) + lnb_ref[0]).astype(out_ref.dtype)


def _derive_vmem_limit(Lm, D, nhead, TQ):
    """Rough per-step VMEM need (double-buffered blocks + scratch + temporaries),
    clamped to a fraction of the chip's physical VMEM."""
    bf, f4 = 2, 4
    hd = D // nhead
    blocks = 2 * (TQ * D * f4          # tgt
                  + TQ * D * bf        # query_pos
                  + 2 * Lm * D * bf    # memory + pos
                  + TQ * D * f4)       # out
    weights = 2 * (4 * D * D * bf + 6 * D * f4)
    scratch = 2 * nhead * Lm * hd * bf
    temps = (2 * nhead * TQ * Lm * f4          # scores + probs (f32)
             + (TQ + 2 * Lm) * D * f4          # q/k/v f32 projections
             + 2 * nhead * TQ * hd * f4        # ctx
             + 4 * TQ * D * f4)                # residual / LN temporaries
    need = int(1.5 * (blocks + weights + scratch + temps)) + (4 << 20)
    try:
        cap = int(pltpu.get_tpu_info().vmem_capacity_bytes)
    except Exception:
        cap = 64 << 20                          # conservative (v7x per-TC)
    return max(16 << 20, min(need, int(cap * 3 // 4)))


def cross_attention_layer_bld(tgt, memory, params, pos=None, query_pos=None,
                              *, nhead, tile_q=128):
    """Batch-major core: tgt (N, Lq, D), memory (N, Lm, D) -> (N, Lq, D)."""
    N, Lq, D = tgt.shape
    Lm = memory.shape[1]
    assert D % nhead == 0, "d_model must be divisible by nhead"
    hd = D // nhead
    f32, bf16 = jnp.float32, jnp.bfloat16

    if query_pos is None:
        query_pos = jnp.zeros_like(tgt)
    if pos is None:
        pos = jnp.zeros_like(memory)

    # Activations feeding MXU operands stream as bf16.
    mem_b = memory.astype(bf16)
    pos_b = pos.astype(bf16)
    qpos_b = query_pos.astype(bf16)

    # Weights: bf16, attention scale folded into wq / bq at trace time.
    scale = 1.0 / (hd ** 0.5)
    wq = (params["wq"].astype(f32) * scale).astype(bf16)
    wk = params["wk"].astype(bf16)
    wv = params["wv"].astype(bf16)
    wo_h = params["wo"].astype(bf16).reshape(nhead, hd, D)   # per-head (H, hd, D)

    bq = (params["bq"].astype(f32) * scale).reshape(1, D)
    bk = params["bk"].astype(f32).reshape(1, D)
    bv = params["bv"].astype(f32).reshape(1, D)
    bo = params["bo"].astype(f32).reshape(1, D)
    lnw = params["ln_w"].astype(f32).reshape(1, D)
    lnb = params["ln_b"].astype(f32).reshape(1, D)

    # Q tiling: fixed tile, cdiv grid, Pallas pads the last partial tile.
    TQ = min(tile_q, Lq)
    if TQ != Lq:
        TQ = max(8, (TQ // 8) * 8)
    n_q = pl.cdiv(Lq, TQ)
    grid = (N, n_q)

    # K/V cached in scratch across q tiles (q axis sequential) when the batch
    # axis already provides parallel grid points; otherwise recompute per tile
    # so both axes can be 'parallel' (v7x megacore with N == 1).
    cache_kv = (N > 1) or (n_q == 1)
    dims = ("parallel", "arbitrary") if cache_kv else ("parallel", "parallel")

    q_spec = pl.BlockSpec((1, TQ, D), lambda b, qi: (b, qi, 0))
    m_spec = pl.BlockSpec((1, Lm, D), lambda b, qi: (b, 0, 0))

    def const_spec(shape):
        nd = len(shape)
        return pl.BlockSpec(shape, lambda b, qi, _nd=nd: (0,) * _nd)

    # Advisory cost estimate for XLA scheduling around the custom call.
    flops = int(2 * N * (2 * Lq * D * D + 2 * Lm * D * D + 2 * Lq * Lm * D))
    transcendentals = int(N * nhead * Lq * Lm)
    bytes_accessed = int(
        tgt.size * tgt.dtype.itemsize
        + (mem_b.size + pos_b.size + qpos_b.size) * 2
        + (wq.size + wk.size + wv.size + wo_h.size) * 2
        + (bq.size + bk.size + bv.size + bo.size + lnw.size + lnb.size) * 4
        + N * Lq * D * tgt.dtype.itemsize)
    cost = pl.CostEstimate(flops=flops, transcendentals=transcendentals,
                           bytes_accessed=bytes_accessed)

    kernel = functools.partial(_cross_attn_kernel, nhead=nhead, cache_kv=cache_kv)

    return pl.pallas_call(
        kernel,
        out_shape=jax.ShapeDtypeStruct((N, Lq, D), tgt.dtype),
        grid_spec=pltpu.PrefetchScalarGridSpec(
            num_scalar_prefetch=0,
            grid=grid,
            in_specs=[
                q_spec,                        # tgt (f32)
                m_spec,                        # memory (bf16)
                q_spec,                        # query_pos (bf16)
                m_spec,                        # pos (bf16)
                const_spec((D, D)),            # wq (scaled, bf16)
                const_spec((D, D)),            # wk
                const_spec((D, D)),            # wv
                const_spec((nhead, hd, D)),    # wo per head
                const_spec((1, D)),            # bq (scaled)
                const_spec((1, D)),            # bk
                const_spec((1, D)),            # bv
                const_spec((1, D)),            # bo
                const_spec((1, D)),            # ln_w
                const_spec((1, D)),            # ln_b
            ],
            out_specs=q_spec,
            scratch_shapes=[
                pltpu.VMEM((nhead, Lm, hd), bf16),   # kh (head-split K)
                pltpu.VMEM((nhead, Lm, hd), bf16),   # vh (head-split V)
            ],
        ),
        compiler_params=pltpu.CompilerParams(
            dimension_semantics=dims,
            vmem_limit_bytes=_derive_vmem_limit(Lm, D, nhead, TQ)),
        cost_estimate=cost,
    )(tgt, mem_b, qpos_b, pos_b,
      wq, wk, wv, wo_h,
      bq, bk, bv, bo, lnw, lnb)


def cross_attention_layer(tgt, memory, params, pos=None, query_pos=None,
                          *, nhead, tile_q=128):
    """PyTorch-layout adapter: tgt (Lq, N, D), memory (Lm, N, D) -> (Lq, N, D).

    Hot paths should call cross_attention_layer_bld directly and skip these
    HBM-level transposes.
    """
    t = lambda x: None if x is None else jnp.transpose(x, (1, 0, 2))
    out = cross_attention_layer_bld(t(tgt), t(memory), params,
                                    pos=t(pos), query_pos=t(query_pos),
                                    nhead=nhead, tile_q=tile_q)
    return jnp.transpose(out, (1, 0, 2))


def _init_params(key, d_model):
    """xavier_uniform for weights (dim>1), zeros for biases, LN = (ones, zeros).
    Weights stored transposed vs. PyTorch so y = x @ W + b."""
    k1, k2 = jax.random.split(key)

    def xavier(k, shape):
        fan_out, fan_in = shape
        limit = (6.0 / (fan_in + fan_out)) ** 0.5
        return jax.random.uniform(k, shape, jnp.float32, -limit, limit)

    in_proj_w = xavier(k1, (3 * d_model, d_model))
    out_w = xavier(k2, (d_model, d_model))
    zeros = jnp.zeros((d_model,), jnp.float32)
    return {
        "wq": in_proj_w[0 * d_model:1 * d_model].T,
        "wk": in_proj_w[1 * d_model:2 * d_model].T,
        "wv": in_proj_w[2 * d_model:3 * d_model].T,
        "wo": out_w.T,
        "bq": zeros, "bk": zeros, "bv": zeros, "bo": zeros,
        "ln_w": jnp.ones((d_model,), jnp.float32),
        "ln_b": jnp.zeros((d_model,), jnp.float32),
    }


def _reference_bld(tgt, memory, params, pos, query_pos, nhead):
    """Pure-JAX reference of forward_post (dropout=0), batch-major (N, L, D),
    mirroring the kernel's bf16-operand / f32-accumulate precision choices."""
    f32, bf16 = jnp.float32, jnp.bfloat16
    N, Lq, D = tgt.shape
    hd = D // nhead
    scale = 1.0 / (hd ** 0.5)

    wq = (params["wq"].astype(f32) * scale).astype(bf16)
    wk = params["wk"].astype(bf16)
    wv = params["wv"].astype(bf16)
    wo_h = params["wo"].astype(bf16).reshape(nhead, hd, D)
    bq = params["bq"].astype(f32) * scale
    bk = params["bk"].astype(f32)
    bv = params["bv"].astype(f32)
    bo = params["bo"].astype(f32)

    mem_b = memory.astype(bf16)
    pos_b = pos.astype(bf16)
    qpos_b = query_pos.astype(bf16)

    q_in = tgt.astype(bf16) + qpos_b
    k_in = mem_b + pos_b

    def proj(x, w, b):
        return jnp.einsum('nld,de->nle', x, w, preferred_element_type=f32) + b

    def split(x):  # (N, L, D) f32 -> (N, H, L, hd) bf16
        n, l, _ = x.shape
        return jnp.transpose(x.astype(bf16).reshape(n, l, nhead, hd), (0, 2, 1, 3))

    qh = split(proj(q_in, wq, bq))
    kh = split(proj(k_in, wk, bk))
    vh = split(proj(mem_b, wv, bv))

    s = jnp.einsum('nhqd,nhkd->nhqk', qh, kh, preferred_element_type=f32)
    s = s - jnp.max(s, axis=-1, keepdims=True)
    p = jnp.exp(s)
    l = jnp.sum(p, axis=-1, keepdims=True)
    ctx = jnp.einsum('nhqk,nhkd->nhqd', p.astype(bf16), vh,
                     preferred_element_type=f32)
    ctx = (ctx / l).astype(bf16)
    attn = jnp.einsum('nhqd,hde->nqe', ctx, wo_h, preferred_element_type=f32) + bo

    x = tgt.astype(f32) + attn
    mu = jnp.mean(x, axis=-1, keepdims=True)
    var = jnp.mean((x - mu) ** 2, axis=-1, keepdims=True)
    return (x - mu) * jax.lax.rsqrt(var + 1e-5) * params["ln_w"] + params["ln_b"]


if __name__ == "__main__":
    d_model, nhead = 32, 4
    key = jax.random.PRNGKey(0)
    kp, kt, km, kpos, kqpos = jax.random.split(key, 5)
    params = _init_params(kp, d_model)

    # --- Case 1: batch-major, N=2 (K/V cached across q tiles, batch parallel).
    N, Lq, Lm = 2, 8, 16
    tgt = jax.random.normal(kt, (N, Lq, d_model), jnp.float32)
    memory = jax.random.normal(km, (N, Lm, d_model), jnp.float32)
    pos = jax.random.normal(kpos, (N, Lm, d_model), jnp.float32)
    qpos = jax.random.normal(kqpos, (N, Lq, d_model), jnp.float32)

    fn = jax.jit(functools.partial(cross_attention_layer_bld, nhead=nhead))
    out = jax.block_until_ready(fn(tgt, memory, params, pos=pos, query_pos=qpos))
    ref = _reference_bld(tgt, memory, params, pos, qpos, nhead)
    assert out.shape == (N, Lq, d_model)
    assert jnp.allclose(out.astype(jnp.float32), ref, atol=1e-2, rtol=1e-2), \
        "mismatch vs reference (case 1)"

    # --- Case 2: N=1, ragged Lq with explicit q tiling (padded tail tile;
    #     K/V recomputed per tile so both grid axes stay 'parallel').
    N2, Lq2, Lm2 = 1, 40, 24
    tgt2 = jax.random.normal(jax.random.PRNGKey(1), (N2, Lq2, d_model), jnp.float32)
    mem2 = jax.random.normal(jax.random.PRNGKey(2), (N2, Lm2, d_model), jnp.float32)
    pos2 = jax.random.normal(jax.random.PRNGKey(3), (N2, Lm2, d_model), jnp.float32)
    qpos2 = jax.random.normal(jax.random.PRNGKey(4), (N2, Lq2, d_model), jnp.float32)
    fn2 = jax.jit(functools.partial(cross_attention_layer_bld, nhead=nhead, tile_q=32))
    out2 = jax.block_until_ready(fn2(tgt2, mem2, params, pos=pos2, query_pos=qpos2))
    ref2 = _reference_bld(tgt2, mem2, params, pos2, qpos2, nhead)
    assert jnp.allclose(out2.astype(jnp.float32), ref2, atol=1e-2, rtol=1e-2), \
        "mismatch vs reference (case 2)"

    # --- Case 3: PyTorch (L, N, D) layout adapter sanity check.
    tln = lambda x: jnp.transpose(x, (1, 0, 2))
    fn3 = jax.jit(functools.partial(cross_attention_layer, nhead=nhead))
    out3 = jax.block_until_ready(
        fn3(tln(tgt), tln(memory), params, pos=tln(pos), query_pos=tln(qpos)))
    assert jnp.allclose(tln(out3).astype(jnp.float32), ref, atol=1e-2, rtol=1e-2), \
        "mismatch vs reference (case 3, adapter)"

    print("KERNEL_OK")
</pallas_src>

<mosaic_0001>
module attributes {stable_mosaic.version = 11 : i64} {
  func.func @_cross_attn_kernel(%arg0: i32, %arg1: i32, %arg2: memref<1x8x32xf32, #tpu.memory_space<vmem>>, %arg3: memref<1x16x32xbf16, #tpu.memory_space<vmem>>, %arg4: memref<1x8x32xbf16, #tpu.memory_space<vmem>>, %arg5: memref<1x16x32xbf16, #tpu.memory_space<vmem>>, %arg6: memref<32x32xbf16, #tpu.memory_space<vmem>>, %arg7: memref<32x32xbf16, #tpu.memory_space<vmem>>, %arg8: memref<32x32xbf16, #tpu.memory_space<vmem>>, %arg9: memref<4x8x32xbf16, #tpu.memory_space<vmem>>, %arg10: memref<1x32xf32, #tpu.memory_space<vmem>>, %arg11: memref<1x32xf32, #tpu.memory_space<vmem>>, %arg12: memref<1x32xf32, #tpu.memory_space<vmem>>, %arg13: memref<1x32xf32, #tpu.memory_space<vmem>>, %arg14: memref<1x32xf32, #tpu.memory_space<vmem>>, %arg15: memref<1x32xf32, #tpu.memory_space<vmem>>, %arg16: memref<1x8x32xf32, #tpu.memory_space<vmem>>, %arg17: memref<4x16x8xbf16, #tpu.memory_space<vmem>>, %arg18: memref<4x16x8xbf16, #tpu.memory_space<vmem>>) attributes {dimension_semantics = [#tpu.dimension_semantics<parallel>, #tpu.dimension_semantics<arbitrary>], iteration_bounds = array<i64: 2, 1>, scalar_prefetch = 0 : i64, scratch_operands = 2 : i64, tpu.core_type = #tpu.core_type<tc>, window_params = [{transform_indices = @transform_0, window_bounds = array<i64: 1, 8, 32>}, {transform_indices = @transform_1, window_bounds = array<i64: 1, 16, 32>}, {transform_indices = @transform_2, window_bounds = array<i64: 1, 8, 32>}, {transform_indices = @transform_3, window_bounds = array<i64: 1, 16, 32>}, {pipeline_mode = #tpu.pipeline_mode<synchronous>, transform_indices = @transform_4, window_bounds = array<i64: 32, 32>}, {pipeline_mode = #tpu.pipeline_mode<synchronous>, transform_indices = @transform_5, window_bounds = array<i64: 32, 32>}, {pipeline_mode = #tpu.pipeline_mode<synchronous>, transform_indices = @transform_6, window_bounds = array<i64: 32, 32>}, {pipeline_mode = #tpu.pipeline_mode<synchronous>, transform_indices = @transform_7, window_bounds = array<i64: 4, 8, 32>}, {pipeline_mode = #tpu.pipeline_mode<synchronous>, transform_indices = @transform_8, window_bounds = array<i64: 1, 32>}, {pipeline_mode = #tpu.pipeline_mode<synchronous>, transform_indices = @transform_9, window_bounds = array<i64: 1, 32>}, {pipeline_mode = #tpu.pipeline_mode<synchronous>, transform_indices = @transform_10, window_bounds = array<i64: 1, 32>}, {pipeline_mode = #tpu.pipeline_mode<synchronous>, transform_indices = @transform_11, window_bounds = array<i64: 1, 32>}, {pipeline_mode = #tpu.pipeline_mode<synchronous>, transform_indices = @transform_12, window_bounds = array<i64: 1, 32>}, {pipeline_mode = #tpu.pipeline_mode<synchronous>, transform_indices = @transform_13, window_bounds = array<i64: 1, 32>}, {transform_indices = @transform_14, window_bounds = array<i64: 1, 8, 32>}]} {
    %c0_i32 = arith.constant 0 : i32
    %0 = arith.cmpi eq, %arg1, %c0_i32 : i32
    %1 = arith.extui %0 : i1 to i32
    %c0_i32_0 = arith.constant 0 : i32
    %2 = arith.cmpi ne, %1, %c0_i32_0 : i32
    scf.if %2 {
      %c0_47 = arith.constant 0 : index
      %c0_48 = arith.constant 0 : index
      %c0_49 = arith.constant 0 : index
      %93 = vector.load %arg3[%c0_47, %c0_48, %c0_49] : memref<1x16x32xbf16, #tpu.memory_space<vmem>>, vector<1x16x32xbf16>
      %94 = vector.shape_cast %93 : vector<1x16x32xbf16> to vector<16x32xbf16>
      %c0_50 = arith.constant 0 : index
      %c0_51 = arith.constant 0 : index
      %c0_52 = arith.constant 0 : index
      %95 = vector.load %arg5[%c0_50, %c0_51, %c0_52] : memref<1x16x32xbf16, #tpu.memory_space<vmem>>, vector<1x16x32xbf16>
      %96 = vector.shape_cast %95 : vector<1x16x32xbf16> to vector<16x32xbf16>
      %97 = arith.addf %94, %96 : vector<16x32xbf16>
      %c0_53 = arith.constant 0 : index
      %c0_54 = arith.constant 0 : index
      %98 = vector.load %arg7[%c0_53, %c0_54] : memref<32x32xbf16, #tpu.memory_space<vmem>>, vector<32x32xbf16>
      %cst_55 = arith.constant dense<0.000000e+00> : vector<16x32xf32>
      %99 = tpu.matmul %97, %98, %cst_55 {dimension_numbers = #tpu.dot_dimension_numbers<[1], [0], [0], [1], [0, 0, 1, 1], [], []>} : vector<16x32xbf16>, vector<32x32xbf16>, vector<16x32xf32> -> vector<16x32xf32>
      %c0_56 = arith.constant 0 : index
      %c0_57 = arith.constant 0 : index
      %100 = vector.load %arg11[%c0_56, %c0_57] : memref<1x32xf32, #tpu.memory_space<vmem>>, vector<1x32xf32>
      %101 = vector.shape_cast %100 : vector<1x32xf32> to vector<32xf32>
      %102 = vector.shape_cast %101 : vector<32xf32> to vector<1x32xf32>
      %103 = vector.broadcast %102 : vector<1x32xf32> to vector<16x32xf32>
      %104 = arith.addf %99, %103 : vector<16x32xf32>
      %c0_58 = arith.constant 0 : index
      %c0_59 = arith.constant 0 : index
      %105 = vector.load %arg8[%c0_58, %c0_59] : memref<32x32xbf16, #tpu.memory_space<vmem>>, vector<32x32xbf16>
      %cst_60 = arith.constant dense<0.000000e+00> : vector<16x32xf32>
      %106 = tpu.matmul %94, %105, %cst_60 {dimension_numbers = #tpu.dot_dimension_numbers<[1], [0], [0], [1], [0, 0, 1, 1], [], []>} : vector<16x32xbf16>, vector<32x32xbf16>, vector<16x32xf32> -> vector<16x32xf32>
      %c0_61 = arith.constant 0 : index
      %c0_62 = arith.constant 0 : index
      %107 = vector.load %arg12[%c0_61, %c0_62] : memref<1x32xf32, #tpu.memory_space<vmem>>, vector<1x32xf32>
      %108 = vector.shape_cast %107 : vector<1x32xf32> to vector<32xf32>
      %109 = vector.shape_cast %108 : vector<32xf32> to vector<1x32xf32>
      %110 = vector.broadcast %109 : vector<1x32xf32> to vector<16x32xf32>
      %111 = arith.addf %106, %110 : vector<16x32xf32>
      %112 = arith.truncf %104 : vector<16x32xf32> to vector<16x32xbf16>
      %113 = vector.shape_cast %112 : vector<16x32xbf16> to vector<16x4x8xbf16>
      %114 = tpu.transpose %113, [1, 0, 2] : vector<16x4x8xbf16> -> vector<4x16x8xbf16>
      %115 = arith.truncf %111 : vector<16x32xf32> to vector<16x32xbf16>
      %116 = vector.shape_cast %115 : vector<16x32xbf16> to vector<16x4x8xbf16>
      %117 = tpu.transpose %116, [1, 0, 2] : vector<16x4x8xbf16> -> vector<4x16x8xbf16>
      %c0_63 = arith.constant 0 : index
      %c0_64 = arith.constant 0 : index
      %c0_65 = arith.constant 0 : index
      %118 = vector.load %arg17[%c0_63, %c0_64, %c0_65] : memref<4x16x8xbf16, #tpu.memory_space<vmem>>, vector<4x16x8xbf16>
      tpu.vector_store %arg17[%c0_63, %c0_64, %c0_65], %114 {strides = array<i32>} : memref<4x16x8xbf16, #tpu.memory_space<vmem>>, vector<4x16x8xbf16>,
      %c0_66 = arith.constant 0 : index
      %c0_67 = arith.constant 0 : index
      %c0_68 = arith.constant 0 : index
      %119 = vector.load %arg18[%c0_66, %c0_67, %c0_68] : memref<4x16x8xbf16, #tpu.memory_space<vmem>>, vector<4x16x8xbf16>
      tpu.vector_store %arg18[%c0_66, %c0_67, %c0_68], %117 {strides = array<i32>} : memref<4x16x8xbf16, #tpu.memory_space<vmem>>, vector<4x16x8xbf16>,
    } else {
    }
    %c0 = arith.constant 0 : index
    %c0_1 = arith.constant 0 : index
    %c0_2 = arith.constant 0 : index
    %3 = vector.load %arg17[%c0, %c0_1, %c0_2] : memref<4x16x8xbf16, #tpu.memory_space<vmem>>, vector<4x16x8xbf16>
    %c0_3 = arith.constant 0 : index
    %c0_4 = arith.constant 0 : index
    %c0_5 = arith.constant 0 : index
    %4 = vector.load %arg18[%c0_3, %c0_4, %c0_5] : memref<4x16x8xbf16, #tpu.memory_space<vmem>>, vector<4x16x8xbf16>
    %c0_6 = arith.constant 0 : index
    %c0_7 = arith.constant 0 : index
    %c0_8 = arith.constant 0 : index
    %5 = vector.load %arg2[%c0_6, %c0_7, %c0_8] : memref<1x8x32xf32, #tpu.memory_space<vmem>>, vector<1x8x32xf32>
    %6 = vector.shape_cast %5 : vector<1x8x32xf32> to vector<8x32xf32>
    %7 = arith.truncf %6 : vector<8x32xf32> to vector<8x32xbf16>
    %c0_9 = arith.constant 0 : index
    %c0_10 = arith.constant 0 : index
    %c0_11 = arith.constant 0 : index
    %8 = vector.load %arg4[%c0_9, %c0_10, %c0_11] : memref<1x8x32xbf16, #tpu.memory_space<vmem>>, vector<1x8x32xbf16>
    %9 = vector.shape_cast %8 : vector<1x8x32xbf16> to vector<8x32xbf16>
    %10 = arith.addf %7, %9 : vector<8x32xbf16>
    %c0_12 = arith.constant 0 : index
    %c0_13 = arith.constant 0 : index
    %11 = vector.load %arg6[%c0_12, %c0_13] : memref<32x32xbf16, #tpu.memory_space<vmem>>, vector<32x32xbf16>
    %cst = arith.constant dense<0.000000e+00> : vector<8x32xf32>
    %12 = tpu.matmul %10, %11, %cst {dimension_numbers = #tpu.dot_dimension_numbers<[1], [0], [0], [1], [0, 0, 1, 1], [], []>} : vector<8x32xbf16>, vector<32x32xbf16>, vector<8x32xf32> -> vector<8x32xf32>
    %c0_14 = arith.constant 0 : index
    %c0_15 = arith.constant 0 : index
    %13 = vector.load %arg10[%c0_14, %c0_15] : memref<1x32xf32, #tpu.memory_space<vmem>>, vector<1x32xf32>
    %14 = vector.shape_cast %13 : vector<1x32xf32> to vector<32xf32>
    %15 = vector.shape_cast %14 : vector<32xf32> to vector<1x32xf32>
    %16 = vector.broadcast %15 : vector<1x32xf32> to vector<8x32xf32>
    %17 = arith.addf %12, %16 : vector<8x32xf32>
    %18 = arith.truncf %17 : vector<8x32xf32> to vector<8x32xbf16>
    %19 = vector.shape_cast %18 : vector<8x32xbf16> to vector<8x4x8xbf16>
    %20 = tpu.transpose %19, [1, 0, 2] : vector<8x4x8xbf16> -> vector<4x8x8xbf16>
    "tpu.trace_start"() <{level = 10 : i32, message = "hqd,hkd->hqk"}> : () -> ()
    %cst_16 = arith.constant dense<0.000000e+00> : vector<4x8x16xf32>
    %21 = tpu.matmul %20, %3, %cst_16 {dimension_numbers = #tpu.dot_dimension_numbers<[2], [2], [1], [1], [0, 0, 0, 1, 1, 1], [0], [0]>} : vector<4x8x8xbf16>, vector<4x16x8xbf16>, vector<4x8x16xf32> -> vector<4x8x16xf32>
    "tpu.trace_stop"() : () -> ()
    %cst_17 = arith.constant dense<0xFF800000> : vector<4x8xf32>
    %22 = vector.multi_reduction <maximumf>, %21, %cst_17 [2] : vector<4x8x16xf32> to vector<4x8xf32>
    %23 = vector.shape_cast %22 : vector<4x8xf32> to vector<4x8x1xf32>
    %24 = vector.broadcast %23 : vector<4x8x1xf32> to vector<4x8x16xf32>
    %25 = arith.subf %21, %24 : vector<4x8x16xf32>
    %26 = math.exp %25 : vector<4x8x16xf32>
    %cst_18 = arith.constant dense<0.000000e+00> : vector<4x8xf32>
    %27 = vector.multi_reduction <add>, %26, %cst_18 [2] : vector<4x8x16xf32> to vector<4x8xf32>
    %28 = vector.shape_cast %27 : vector<4x8xf32> to vector<4x8x1xf32>
    %29 = arith.truncf %26 : vector<4x8x16xf32> to vector<4x8x16xbf16>
    "tpu.trace_start"() <{level = 10 : i32, message = "hqk,hkd->hqd"}> : () -> ()
    %cst_19 = arith.constant dense<0.000000e+00> : vector<4x8x8xf32>
    %30 = tpu.matmul %29, %4, %cst_19 {dimension_numbers = #tpu.dot_dimension_numbers<[2], [1], [1], [2], [0, 0, 0, 1, 1, 2], [0], [0]>} : vector<4x8x16xbf16>, vector<4x16x8xbf16>, vector<4x8x8xf32> -> vector<4x8x8xf32>
    "tpu.trace_stop"() : () -> ()
    %31 = tpu.reciprocal %28 {approx = true} : vector<4x8x1xf32> -> vector<4x8x1xf32>
    %32 = vector.broadcast %31 : vector<4x8x1xf32> to vector<4x8x8xf32>
    %33 = arith.mulf %30, %32 : vector<4x8x8xf32>
    %34 = arith.truncf %33 : vector<4x8x8xf32> to vector<4x8x8xbf16>
    %35 = vector.extract_strided_slice %34 {offsets = [0, 0, 0], sizes = [1, 8, 8], strides = [1, 1, 1]} : vector<4x8x8xbf16> to vector<1x8x8xbf16>
    %36 = vector.shape_cast %35 : vector<1x8x8xbf16> to vector<8x8xbf16>
    %c0_20 = arith.constant 0 : index
    %c0_21 = arith.constant 0 : index
    %c0_22 = arith.constant 0 : index
    %37 = vector.load %arg9[%c0_20, %c0_21, %c0_22] : memref<4x8x32xbf16, #tpu.memory_space<vmem>>, vector<1x8x32xbf16>
    %38 = vector.shape_cast %37 : vector<1x8x32xbf16> to vector<8x32xbf16>
    %cst_23 = arith.constant dense<0.000000e+00> : vector<8x32xf32>
    %39 = tpu.matmul %36, %38, %cst_23 {dimension_numbers = #tpu.dot_dimension_numbers<[1], [0], [0], [1], [0, 0, 1, 1], [], []>} : vector<8x8xbf16>, vector<8x32xbf16>, vector<8x32xf32> -> vector<8x32xf32>
    %40 = vector.extract_strided_slice %34 {offsets = [1, 0, 0], sizes = [1, 8, 8], strides = [1, 1, 1]} : vector<4x8x8xbf16> to vector<1x8x8xbf16>
    %41 = vector.shape_cast %40 : vector<1x8x8xbf16> to vector<8x8xbf16>
    %c1 = arith.constant 1 : index
    %c0_24 = arith.constant 0 : index
    %c0_25 = arith.constant 0 : index
    %42 = vector.load %arg9[%c1, %c0_24, %c0_25] : memref<4x8x32xbf16, #tpu.memory_space<vmem>>, vector<1x8x32xbf16>
    %43 = vector.shape_cast %42 : vector<1x8x32xbf16> to vector<8x32xbf16>
    %cst_26 = arith.constant dense<0.000000e+00> : vector<8x32xf32>
    %44 = tpu.matmul %41, %43, %cst_26 {dimension_numbers = #tpu.dot_dimension_numbers<[1], [0], [0], [1], [0, 0, 1, 1], [], []>} : vector<8x8xbf16>, vector<8x32xbf16>, vector<8x32xf32> -> vector<8x32xf32>
    %45 = arith.addf %39, %44 : vector<8x32xf32>
    %46 = vector.extract_strided_slice %34 {offsets = [2, 0, 0], sizes = [1, 8, 8], strides = [1, 1, 1]} : vector<4x8x8xbf16> to vector<1x8x8xbf16>
    %47 = vector.shape_cast %46 : vector<1x8x8xbf16> to vector<8x8xbf16>
    %c2 = arith.constant 2 : index
    %c0_27 = arith.constant 0 : index
    %c0_28 = arith.constant 0 : index
    %48 = vector.load %arg9[%c2, %c0_27, %c0_28] : memref<4x8x32xbf16, #tpu.memory_space<vmem>>, vector<1x8x32xbf16>
    %49 = vector.shape_cast %48 : vector<1x8x32xbf16> to vector<8x32xbf16>
    %cst_29 = arith.constant dense<0.000000e+00> : vector<8x32xf32>
    %50 = tpu.matmul %47, %49, %cst_29 {dimension_numbers = #tpu.dot_dimension_numbers<[1], [0], [0], [1], [0, 0, 1, 1], [], []>} : vector<8x8xbf16>, vector<8x32xbf16>, vector<8x32xf32> -> vector<8x32xf32>
    %51 = arith.addf %45, %50 : vector<8x32xf32>
    %52 = vector.extract_strided_slice %34 {offsets = [3, 0, 0], sizes = [1, 8, 8], strides = [1, 1, 1]} : vector<4x8x8xbf16> to vector<1x8x8xbf16>
    %53 = vector.shape_cast %52 : vector<1x8x8xbf16> to vector<8x8xbf16>
    %c3 = arith.constant 3 : index
    %c0_30 = arith.constant 0 : index
    %c0_31 = arith.constant 0 : index
    %54 = vector.load %arg9[%c3, %c0_30, %c0_31] : memref<4x8x32xbf16, #tpu.memory_space<vmem>>, vector<1x8x32xbf16>
    %55 = vector.shape_cast %54 : vector<1x8x32xbf16> to vector<8x32xbf16>
    %cst_32 = arith.constant dense<0.000000e+00> : vector<8x32xf32>
    %56 = tpu.matmul %53, %55, %cst_32 {dimension_numbers = #tpu.dot_dimension_numbers<[1], [0], [0], [1], [0, 0, 1, 1], [], []>} : vector<8x8xbf16>, vector<8x32xbf16>, vector<8x32xf32> -> vector<8x32xf32>
    %57 = arith.addf %51, %56 : vector<8x32xf32>
    %c0_33 = arith.constant 0 : index
    %c0_34 = arith.constant 0 : index
    %58 = vector.load %arg13[%c0_33, %c0_34] : memref<1x32xf32, #tpu.memory_space<vmem>>, vector<1x32xf32>
    %59 = vector.shape_cast %58 : vector<1x32xf32> to vector<32xf32>
    %60 = vector.shape_cast %59 : vector<32xf32> to vector<1x32xf32>
    %61 = vector.broadcast %60 : vector<1x32xf32> to vector<8x32xf32>
    %62 = arith.addf %57, %61 : vector<8x32xf32>
    %63 = arith.addf %6, %62 : vector<8x32xf32>
    %cst_35 = arith.constant dense<0.000000e+00> : vector<8xf32>
    %64 = vector.multi_reduction <add>, %63, %cst_35 [1] : vector<8x32xf32> to vector<8xf32>
    %65 = vector.shape_cast %64 : vector<8xf32> to vector<8x1xf32>
    %cst_36 = arith.constant 3.200000e+01 : f32
    %66 = vector.broadcast %cst_36 : f32 to vector<8x1xf32>
    %67 = arith.divf %65, %66 : vector<8x1xf32>
    %68 = vector.broadcast %67 : vector<8x1xf32> to vector<8x32xf32>
    %69 = arith.subf %63, %68 : vector<8x32xf32>
    %70 = arith.mulf %69, %69 : vector<8x32xf32>
    %cst_37 = arith.constant dense<0.000000e+00> : vector<8xf32>
    %71 = vector.multi_reduction <add>, %70, %cst_37 [1] : vector<8x32xf32> to vector<8xf32>
    %72 = vector.shape_cast %71 : vector<8xf32> to vector<8x1xf32>
    %cst_38 = arith.constant 3.200000e+01 : f32
    %73 = vector.broadcast %cst_38 : f32 to vector<8x1xf32>
    %74 = arith.divf %72, %73 : vector<8x1xf32>
    %cst_39 = arith.constant 9.99999974E-6 : f32
    %75 = vector.broadcast %cst_39 : f32 to vector<8x1xf32>
    %76 = arith.addf %74, %75 : vector<8x1xf32>
    %77 = math.rsqrt %76 : vector<8x1xf32>
    %c0_40 = arith.constant 0 : index
    %c0_41 = arith.constant 0 : index
    %78 = vector.load %arg14[%c0_40, %c0_41] : memref<1x32xf32, #tpu.memory_space<vmem>>, vector<1x32xf32>
    %79 = vector.shape_cast %78 : vector<1x32xf32> to vector<32xf32>
    %80 = vector.shape_cast %79 : vector<32xf32> to vector<1x32xf32>
    %81 = vector.broadcast %77 : vector<8x1xf32> to vector<8x32xf32>
    %82 = vector.broadcast %80 : vector<1x32xf32> to vector<8x32xf32>
    %83 = arith.mulf %81, %82 : vector<8x32xf32>
    %84 = arith.mulf %69, %83 : vector<8x32xf32>
    %c0_42 = arith.constant 0 : index
    %c0_43 = arith.constant 0 : index
    %85 = vector.load %arg15[%c0_42, %c0_43] : memref<1x32xf32, #tpu.memory_space<vmem>>, vector<1x32xf32>
    %86 = vector.shape_cast %85 : vector<1x32xf32> to vector<32xf32>
    %87 = vector.shape_cast %86 : vector<32xf32> to vector<1x32xf32>
    %88 = vector.broadcast %87 : vector<1x32xf32> to vector<8x32xf32>
    %89 = arith.addf %84, %88 : vector<8x32xf32>
    %c0_44 = arith.constant 0 : index
    %c0_45 = arith.constant 0 : index
    %c0_46 = arith.constant 0 : index
    %90 = vector.load %arg16[%c0_44, %c0_45, %c0_46] : memref<1x8x32xf32, #tpu.memory_space<vmem>>, vector<1x8x32xf32>
    %91 = vector.shape_cast %90 : vector<1x8x32xf32> to vector<8x32xf32>
    %92 = vector.shape_cast %89 : vector<8x32xf32> to vector<1x8x32xf32>
    tpu.vector_store %arg16[%c0_44, %c0_45, %c0_46], %92 {strides = array<i32>} : memref<1x8x32xf32, #tpu.memory_space<vmem>>, vector<1x8x32xf32>,
    return
  }
  func.func @transform_0(%arg0: i32, %arg1: i32) -> (i32, i32, i32) {
    %c0_i32 = arith.constant 0 : i32
    %c0_i32_0 = arith.constant 0 : i32
    return %arg0, %arg1, %c0_i32 : i32, i32, i32
  }
  func.func @transform_1(%arg0: i32, %arg1: i32) -> (i32, i32, i32) {
    %c0_i32 = arith.constant 0 : i32
    %c0_i32_0 = arith.constant 0 : i32
    %c0_i32_1 = arith.constant 0 : i32
    return %arg0, %c0_i32, %c0_i32_0 : i32, i32, i32
  }
  func.func @transform_2(%arg0: i32, %arg1: i32) -> (i32, i32, i32) {
    %c0_i32 = arith.constant 0 : i32
    %c0_i32_0 = arith.constant 0 : i32
    return %arg0, %arg1, %c0_i32 : i32, i32, i32
  }
  func.func @transform_3(%arg0: i32, %arg1: i32) -> (i32, i32, i32) {
    %c0_i32 = arith.constant 0 : i32
    %c0_i32_0 = arith.constant 0 : i32
    %c0_i32_1 = arith.constant 0 : i32
    return %arg0, %c0_i32, %c0_i32_0 : i32, i32, i32
  }
  func.func @transform_4(%arg0: i32, %arg1: i32) -> (i32, i32) {
    %c0_i32 = arith.constant 0 : i32
    %c0_i32_0 = arith.constant 0 : i32
    %c0_i32_1 = arith.constant 0 : i32
    return %c0_i32, %c0_i32_0 : i32, i32
  }
  func.func @transform_5(%arg0: i32, %arg1: i32) -> (i32, i32) {
    %c0_i32 = arith.constant 0 : i32
    %c0_i32_0 = arith.constant 0 : i32
    %c0_i32_1 = arith.constant 0 : i32
    return %c0_i32, %c0_i32_0 : i32, i32
  }
  func.func @transform_6(%arg0: i32, %arg1: i32) -> (i32, i32) {
    %c0_i32 = arith.constant 0 : i32
    %c0_i32_0 = arith.constant 0 : i32
    %c0_i32_1 = arith.constant 0 : i32
    return %c0_i32, %c0_i32_0 : i32, i32
  }
  func.func @transform_7(%arg0: i32, %arg1: i32) -> (i32, i32, i32) {
    %c0_i32 = arith.constant 0 : i32
    %c0_i32_0 = arith.constant 0 : i32
    %c0_i32_1 = arith.constant 0 : i32
    %c0_i32_2 = arith.constant 0 : i32
    return %c0_i32, %c0_i32_0, %c0_i32_1 : i32, i32, i32
  }
  func.func @transform_8(%arg0: i32, %arg1: i32) -> (i32, i32) {
    %c0_i32 = arith.constant 0 : i32
    %c0_i32_0 = arith.constant 0 : i32
    %c0_i32_1 = arith.constant 0 : i32
    return %c0_i32, %c0_i32_0 : i32, i32
  }
  func.func @transform_9(%arg0: i32, %arg1: i32) -> (i32, i32) {
    %c0_i32 = arith.constant 0 : i32
    %c0_i32_0 = arith.constant 0 : i32
    %c0_i32_1 = arith.constant 0 : i32
    return %c0_i32, %c0_i32_0 : i32, i32
  }
  func.func @transform_10(%arg0: i32, %arg1: i32) -> (i32, i32) {
    %c0_i32 = arith.constant 0 : i32
    %c0_i32_0 = arith.constant 0 : i32
    %c0_i32_1 = arith.constant 0 : i32
    return %c0_i32, %c0_i32_0 : i32, i32
  }
  func.func @transform_11(%arg0: i32, %arg1: i32) -> (i32, i32) {
    %c0_i32 = arith.constant 0 : i32
    %c0_i32_0 = arith.constant 0 : i32
    %c0_i32_1 = arith.constant 0 : i32
    return %c0_i32, %c0_i32_0 : i32, i32
  }
  func.func @transform_12(%arg0: i32, %arg1: i32) -> (i32, i32) {
    %c0_i32 = arith.constant 0 : i32
    %c0_i32_0 = arith.constant 0 : i32
    %c0_i32_1 = arith.constant 0 : i32
    return %c0_i32, %c0_i32_0 : i32, i32
  }
  func.func @transform_13(%arg0: i32, %arg1: i32) -> (i32, i32) {
    %c0_i32 = arith.constant 0 : i32
    %c0_i32_0 = arith.constant 0 : i32
    %c0_i32_1 = arith.constant 0 : i32
    return %c0_i32, %c0_i32_0 : i32, i32
  }
  func.func @transform_14(%arg0: i32, %arg1: i32) -> (i32, i32, i32) {
    %c0_i32 = arith.constant 0 : i32
    %c0_i32_0 = arith.constant 0 : i32
    return %arg0, %arg1, %c0_i32 : i32, i32, i32
  }
}

</mosaic_0001>

<llo_original>
// kernel: cross_attention_layer_bld.1
$region0: #{cross_attention_layer_bld.1}
  #allocation0 [shape = 'u32[]', space=smem, size = 0x4, offset = 0x4, fixed_abs, tag = 'smem constant byte address 0x4 - core index']
  #allocation1 [shape = 'u32[144,128]{1,0:T(1,128)}', space=vmem, size = 0x12000, scoped, tag = 'internal scratch']
  #allocation2 [shape = 'bf16[4,16,8]{2,1,0:T(16,128)(2,1)}', space=vmem, size = 0x4000, scoped, tag = 'scratch operand']
  #allocation3 [shape = 'bf16[4,16,8]{2,1,0:T(16,128)(2,1)}', space=vmem, size = 0x4000, scoped, tag = 'scratch operand']
  %s0 = inlined_call_operand.vmem [shape: f32[2,8,32], index: 0, kind: input, shape index: {}]
  %s1 = inlined_call_operand.vmem [shape: bf16[2,16,32], index: 1, kind: input, shape index: {}]
  %s2 = inlined_call_operand.vmem [shape: bf16[2,8,32], index: 2, kind: input, shape index: {}]
  %s3 = inlined_call_operand.vmem [shape: bf16[2,16,32], index: 3, kind: input, shape index: {}]
  %s4 = inlined_call_operand.vmem [shape: bf16[32,32], index: 4, kind: input, shape index: {}]
  %s5 = inlined_call_operand.vmem [shape: bf16[32,32], index: 5, kind: input, shape index: {}]
  %s6 = inlined_call_operand.vmem [shape: bf16[32,32], index: 6, kind: input, shape index: {}]
  %s7 = inlined_call_operand.vmem [shape: bf16[4,8,32], index: 7, kind: input, shape index: {}]
  %s8 = inlined_call_operand.vmem [shape: f32[1,32], index: 8, kind: input, shape index: {}]
  %s9 = inlined_call_operand.vmem [shape: f32[1,32], index: 9, kind: input, shape index: {}]
  %s10 = inlined_call_operand.vmem [shape: f32[1,32], index: 10, kind: input, shape index: {}]
  %s11 = inlined_call_operand.vmem [shape: f32[1,32], index: 11, kind: input, shape index: {}]
  %s12 = inlined_call_operand.vmem [shape: f32[1,32], index: 12, kind: input, shape index: {}]
  %s13 = inlined_call_operand.vmem [shape: f32[1,32], index: 13, kind: input, shape index: {}]
  %s14 = inlined_call_operand.hbm [shape: f32[2,8,32], index: 14, kind: output, shape index: {}]
  %s15 = sld [smem:[#allocation0]]
  $region93: #{cross_attention_layer_bld.1} parent=0
    _
  %s17 = ssub.s32 1, %s15
  %s18 = scalar_select 0, %s17, %s15
  $region1: #{cross_attention_layer_bld.1} parent=0
    #allocation4 [shape = 'u8[8192]{0}', space=vmem, size = 0x2000, scoped, tag = 'output window, operand 0']
    #allocation5 [shape = 's32[2]{0}', space=sflag, size = 0x8, scoped, tag = 'scoped memory for cross_attention_layer_bld.1']
    %19 = vsyncpa [#allocation5], 0
    %s20 = scalar_lea.sflag [#allocation5], 1
    %21 = vsyncpa %s20, 0
    loop: start=0, step=1, limit=4
    $region2: #{cross_attention_layer_bld.1} parent=1 // loop_pre_header
      _
    $region3: #{cross_attention_layer_bld.1} parent=1 // loop_header
      %s23 = sphi 0, %s27
      %p24 = scmp.ge.s32.totalorder %s23, 4
      %s30 = sphi 0, %s42
      %s31 = sphi 0, %s38
      %s32 = sphi 0, %s30
      %s33 = sphi 0, %s31
      %s34 = sphi 0, %s32
      %s35 = sphi 0, %s33
      %s47 = sphi 0, %s49
      %s50 = sphi 0, %s47
      %s51 = sphi 0, %s50
      %s67 = sphi 0, %s51
      %s73 = sphi 0, %s75
      %s76 = sphi 0, %s73
      %s77 = sphi 0, %s76
      %s93 = sphi 0, %s77
      %s101 = sphi 0, %s103
      %s104 = sphi 0, %s101
      %s105 = sphi 0, %s104
      %s121 = sphi 0, %s105
      %s127 = sphi 0, %s129
      %s130 = sphi 0, %s127
      %s131 = sphi 0, %s130
      %s147 = sphi 0, %s131
      %s151 = sphi 0, %s151
      %s153 = sphi 0, %s151
      %s154 = sphi 0, %s153
      %s168 = sphi 0, %s154
      %s172 = sphi 0, %s172
      %s174 = sphi 0, %s172
      %s175 = sphi 0, %s174
      %s189 = sphi 0, %s175
      %s193 = sphi 0, %s193
      %s195 = sphi 0, %s193
      %s196 = sphi 0, %s195
      %s210 = sphi 0, %s196
      %s214 = sphi 0, %s214
      %s216 = sphi 0, %s214
      %s217 = sphi 0, %s216
      %s231 = sphi 0, %s217
      %s235 = sphi 0, %s235
      %s237 = sphi 0, %s235
      %s238 = sphi 0, %s237
      %s252 = sphi 0, %s238
      %s256 = sphi 0, %s256
      %s258 = sphi 0, %s256
      %s259 = sphi 0, %s258
      %s273 = sphi 0, %s259
      %s277 = sphi 0, %s277
      %s279 = sphi 0, %s277
      %s280 = sphi 0, %s279
      %s294 = sphi 0, %s280
      %s298 = sphi 0, %s298
      %s300 = sphi 0, %s298
      %s301 = sphi 0, %s300
      %s315 = sphi 0, %s301
      %s319 = sphi 0, %s319
      %s321 = sphi 0, %s319
      %s322 = sphi 0, %s321
      %s336 = sphi 0, %s322
      %s340 = sphi 0, %s340
      %s342 = sphi 0, %s340
      %s343 = sphi 0, %s342
      %s357 = sphi 0, %s343
      %s365 = sphi 0, %s367
      %s368 = sphi 0, %s365
      %s369 = sphi 0, %s368
      %s385 = sphi 0, %s369
    $region4: #{cross_attention_layer_bld.1} parent=1 // loop_header_branch
      %26 = sbr.rel (%p24) target = $region8
    $region5: #{cross_attention_layer_bld.1} parent=1 // loop_body
      %s28 = ssub.s32 %s23, 1
      %s29 = ssub.s32 %s23, 2
      %s36 = sadd.s32 1, %s31
      %p37 = scmp.ge.s32.totalorder %s36, 1
      %s38 = scalar_select %p37, 0, %s36
      %s39 = sadd.s32 1, %s30
      %s40 = scalar_select %p37, %s39, %s30
      %p41 = scmp.ge.s32.totalorder %s40, 2
      %s42 = scalar_select %p41, 0, %s40
      %s43 = ssub.s32 %s30, %s42
      %s44 = ssub.s32 %s31, %s38
      %s45 = sor.u32 %s43, %s44
      %p46 = scmp.eq.s32.totalorder %s45, 0
      %s48 = sadd.s32 %s47, 1
      %s49 = scalar_select %p46, %s47, %s48
      %p52 = pneg %p46
      %p53 = scmp.eq.s32.totalorder %s23, 1
      %p54 = por %p52, %p53
      %p55 = scmp.ne.s32.totalorder %s47, %s50
      %p56 = scmp.eq.s32.totalorder %s23, 0
      %p57 = por %p55, %p56
      %p58 = scmp.ne.s32.totalorder %s47, %s50
      %p59 = scmp.eq.s32.totalorder %s28, 1
      %p60 = por %p58, %p59
      %p61 = scmp.ne.s32.totalorder %s50, %s51
      %p62 = scmp.eq.s32.totalorder %s28, 0
      %p63 = por %p61, %p62
      %p64 = scmp.ne.s32.totalorder %s50, %s51
      %p65 = scmp.eq.s32.totalorder %s29, 1
      %p66 = por %p64, %p65
      %p68 = scmp.ne.s32.totalorder %s51, %s67
      %p69 = scmp.eq.s32.totalorder %s29, 0
      %p70 = por %p68, %p69
      %s71 = ssub.s32 %s30, %s42
      %p72 = scmp.eq.s32.totalorder %s71, 0
      %s74 = sadd.s32 %s73, 1
      %s75 = scalar_select %p72, %s73, %s74
      %p78 = pneg %p72
      %p79 = scmp.eq.s32.totalorder %s23, 1
      %p80 = por %p78, %p79
      %p81 = scmp.ne.s32.totalorder %s73, %s76
      %p82 = scmp.eq.s32.totalorder %s23, 0
      %p83 = por %p81, %p82
      %p84 = scmp.ne.s32.totalorder %s73, %s76
      %p85 = scmp.eq.s32.totalorder %s28, 1
      %p86 = por %p84, %p85
      %p87 = scmp.ne.s32.totalorder %s76, %s77
      %p88 = scmp.eq.s32.totalorder %s28, 0
      %p89 = por %p87, %p88
      %p90 = scmp.ne.s32.totalorder %s76, %s77
      %p91 = scmp.eq.s32.totalorder %s29, 1
      %p92 = por %p90, %p91
      %p94 = scmp.ne.s32.totalorder %s77, %s93
      %p95 = scmp.eq.s32.totalorder %s29, 0
      %p96 = por %p94, %p95
      %s97 = ssub.s32 %s30, %s42
      %s98 = ssub.s32 %s31, %s38
      %s99 = sor.u32 %s97, %s98
      %p100 = scmp.eq.s32.totalorder %s99, 0
      %s102 = sadd.s32 %s101, 1
      %s103 = scalar_select %p100, %s101, %s102
      %p106 = pneg %p100
      %p107 = scmp.eq.s32.totalorder %s23, 1
      %p108 = por %p106, %p107
      %p109 = scmp.ne.s32.totalorder %s101, %s104
      %p110 = scmp.eq.s32.totalorder %s23, 0
      %p111 = por %p109, %p110
      %p112 = scmp.ne.s32.totalorder %s101, %s104
      %p113 = scmp.eq.s32.totalorder %s28, 1
      %p114 = por %p112, %p113
      %p115 = scmp.ne.s32.totalorder %s104, %s105
      %p116 = scmp.eq.s32.totalorder %s28, 0
      %p117 = por %p115, %p116
      %p118 = scmp.ne.s32.totalorder %s104, %s105
      %p119 = scmp.eq.s32.totalorder %s29, 1
      %p120 = por %p118, %p119
      %p122 = scmp.ne.s32.totalorder %s105, %s121
      %p123 = scmp.eq.s32.totalorder %s29, 0
      %p124 = por %p122, %p123
      %s125 = ssub.s32 %s30, %s42
      %p126 = scmp.eq.s32.totalorder %s125, 0
      %s128 = sadd.s32 %s127, 1
      %s129 = scalar_select %p126, %s127, %s128
      %p132 = pneg %p126
      %p133 = scmp.eq.s32.totalorder %s23, 1
      %p134 = por %p132, %p133
      %p135 = scmp.ne.s32.totalorder %s127, %s130
      %p136 = scmp.eq.s32.totalorder %s23, 0
      %p137 = por %p135, %p136
      %p138 = scmp.ne.s32.totalorder %s127, %s130
      %p139 = scmp.eq.s32.totalorder %s28, 1
      %p140 = por %p138, %p139
      %p141 = scmp.ne.s32.totalorder %s130, %s131
      %p142 = scmp.eq.s32.totalorder %s28, 0
      %p143 = por %p141, %p142
      %p144 = scmp.ne.s32.totalorder %s130, %s131
      %p145 = scmp.eq.s32.totalorder %s29, 1
      %p146 = por %p144, %p145
      %p148 = scmp.ne.s32.totalorder %s131, %s147
      %p149 = scmp.eq.s32.totalorder %s29, 0
      %p150 = por %p148, %p149
      %s152 = sadd.s32 %s151, 1
      %p155 = scmp.eq.s32.totalorder %s23, 1
      %p156 = scmp.ne.s32.totalorder %s151, %s153
      %p157 = scmp.eq.s32.totalorder %s23, 0
      %p158 = por %p156, %p157
      %p159 = scmp.ne.s32.totalorder %s151, %s153
      %p160 = scmp.eq.s32.totalorder %s28, 1
      %p161 = por %p159, %p160
      %p162 = scmp.ne.s32.totalorder %s153, %s154
      %p163 = scmp.eq.s32.totalorder %s28, 0
      %p164 = por %p162, %p163
      %p165 = scmp.ne.s32.totalorder %s153, %s154
      %p166 = scmp.eq.s32.totalorder %s29, 1
      %p167 = por %p165, %p166
      %p169 = scmp.ne.s32.totalorder %s154, %s168
      %p170 = scmp.eq.s32.totalorder %s29, 0
      %p171 = por %p169, %p170
      %s173 = sadd.s32 %s172, 1
      %p176 = scmp.eq.s32.totalorder %s23, 1
      %p177 = scmp.ne.s32.totalorder %s172, %s174
      %p178 = scmp.eq.s32.totalorder %s23, 0
      %p179 = por %p177, %p178
      %p180 = scmp.ne.s32.totalorder %s172, %s174
      %p181 = scmp.eq.s32.totalorder %s28, 1
      %p182 = por %p180, %p181
      %p183 = scmp.ne.s32.totalorder %s174, %s175
      %p184 = scmp.eq.s32.totalorder %s28, 0
      %p185 = por %p183, %p184
      %p186 = scmp.ne.s32.totalorder %s174, %s175
      %p187 = scmp.eq.s32.totalorder %s29, 1
      %p188 = por %p186, %p187
      %p190 = scmp.ne.s32.totalorder %s175, %s189
      %p191 = scmp.eq.s32.totalorder %s29, 0
      %p192 = por %p190, %p191
      %s194 = sadd.s32 %s193, 1
      %p197 = scmp.eq.s32.totalorder %s23, 1
      %p198 = scmp.ne.s32.totalorder %s193, %s195
      %p199 = scmp.eq.s32.totalorder %s23, 0
      %p200 = por %p198, %p199
      %p201 = scmp.ne.s32.totalorder %s193, %s195
      %p202 = scmp.eq.s32.totalorder %s28, 1
      %p203 = por %p201, %p202
      %p204 = scmp.ne.s32.totalorder %s195, %s196
      %p205 = scmp.eq.s32.totalorder %s28, 0
      %p206 = por %p204, %p205
      %p207 = scmp.ne.s32.totalorder %s195, %s196
      %p208 = scmp.eq.s32.totalorder %s29, 1
      %p209 = por %p207, %p208
      %p211 = scmp.ne.s32.totalorder %s196, %s210
      %p212 = scmp.eq.s32.totalorder %s29, 0
      %p213 = por %p211, %p212
      %s215 = sadd.s32 %s214, 1
      %p218 = scmp.eq.s32.totalorder %s23, 1
      %p219 = scmp.ne.s32.totalorder %s214, %s216
      %p220 = scmp.eq.s32.totalorder %s23, 0
      %p221 = por %p219, %p220
      %p222 = scmp.ne.s32.totalorder %s214, %s216
      %p223 = scmp.eq.s32.totalorder %s28, 1
      %p224 = por %p222, %p223
      %p225 = scmp.ne.s32.totalorder %s216, %s217
      %p226 = scmp.eq.s32.totalorder %s28, 0
      %p227 = por %p225, %p226
      %p228 = scmp.ne.s32.totalorder %s216, %s217
      %p229 = scmp.eq.s32.totalorder %s29, 1
      %p230 = por %p228, %p229
      %p232 = scmp.ne.s32.totalorder %s217, %s231
      %p233 = scmp.eq.s32.totalorder %s29, 0
      %p234 = por %p232, %p233
      %s236 = sadd.s32 %s235, 1
      %p239 = scmp.eq.s32.totalorder %s23, 1
      %p240 = scmp.ne.s32.totalorder %s235, %s237
      %p241 = scmp.eq.s32.totalorder %s23, 0
      %p242 = por %p240, %p241
      %p243 = scmp.ne.s32.totalorder %s235, %s237
      %p244 = scmp.eq.s32.totalorder %s28, 1
      %p245 = por %p243, %p244
      %p246 = scmp.ne.s32.totalorder %s237, %s238
      %p247 = scmp.eq.s32.totalorder %s28, 0
      %p248 = por %p246, %p247
      %p249 = scmp.ne.s32.totalorder %s237, %s238
      %p250 = scmp.eq.s32.totalorder %s29, 1
      %p251 = por %p249, %p250
      %p253 = scmp.ne.s32.totalorder %s238, %s252
      %p254 = scmp.eq.s32.totalorder %s29, 0
      %p255 = por %p253, %p254
      %s257 = sadd.s32 %s256, 1
      %p260 = scmp.eq.s32.totalorder %s23, 1
      %p261 = scmp.ne.s32.totalorder %s256, %s258
      %p262 = scmp.eq.s32.totalorder %s23, 0
      %p263 = por %p261, %p262
      %p264 = scmp.ne.s32.totalorder %s256, %s258
      %p265 = scmp.eq.s32.totalorder %s28, 1
      %p266 = por %p264, %p265
      %p267 = scmp.ne.s32.totalorder %s258, %s259
      %p268 = scmp.eq.s32.totalorder %s28, 0
      %p269 = por %p267, %p268
      %p270 = scmp.ne.s32.totalorder %s258, %s259
      %p271 = scmp.eq.s32.totalorder %s29, 1
      %p272 = por %p270, %p271
      %p274 = scmp.ne.s32.totalorder %s259, %s273
      %p275 = scmp.eq.s32.totalorder %s29, 0
      %p276 = por %p274, %p275
      %s278 = sadd.s32 %s277, 1
      %p281 = scmp.eq.s32.totalorder %s23, 1
      %p282 = scmp.ne.s32.totalorder %s277, %s279
      %p283 = scmp.eq.s32.totalorder %s23, 0
      %p284 = por %p282, %p283
      %p285 = scmp.ne.s32.totalorder %s277, %s279
      %p286 = scmp.eq.s32.totalorder %s28, 1
      %p287 = por %p285, %p286
      %p288 = scmp.ne.s32.totalorder %s279, %s280
      %p289 = scmp.eq.s32.totalorder %s28, 0
      %p290 = por %p288, %p289
      %p291 = scmp.ne.s32.totalorder %s279, %s280
      %p292 = scmp.eq.s32.totalorder %s29, 1
      %p293 = por %p291, %p292
      %p295 = scmp.ne.s32.totalorder %s280, %s294
      %p296 = scmp.eq.s32.totalorder %s29, 0
      %p297 = por %p295, %p296
      %s299 = sadd.s32 %s298, 1
      %p302 = scmp.eq.s32.totalorder %s23, 1
      %p303 = scmp.ne.s32.totalorder %s298, %s300
      %p304 = scmp.eq.s32.totalorder %s23, 0
      %p305 = por %p303, %p304
      %p306 = scmp.ne.s32.totalorder %s298, %s300
      %p307 = scmp.eq.s32.totalorder %s28, 1
      %p308 = por %p306, %p307
      %p309 = scmp.ne.s32.totalorder %s300, %s301
      %p310 = scmp.eq.s32.totalorder %s28, 0
      %p311 = por %p309, %p310
      %p312 = scmp.ne.s32.totalorder %s300, %s301
      %p313 = scmp.eq.s32.totalorder %s29, 1
      %p314 = por %p312, %p313
      %p316 = scmp.ne.s32.totalorder %s301, %s315
      %p317 = scmp.eq.s32.totalorder %s29, 0
      %p318 = por %p316, %p317
      %s320 = sadd.s32 %s319, 1
      %p323 = scmp.eq.s32.totalorder %s23, 1
      %p324 = scmp.ne.s32.totalorder %s319, %s321
      %p325 = scmp.eq.s32.totalorder %s23, 0
      %p326 = por %p324, %p325
      %p327 = scmp.ne.s32.totalorder %s319, %s321
      %p328 = scmp.eq.s32.totalorder %s28, 1
      %p329 = por %p327, %p328
      %p330 = scmp.ne.s32.totalorder %s321, %s322
      %p331 = scmp.eq.s32.totalorder %s28, 0
      %p332 = por %p330, %p331
      %p333 = scmp.ne.s32.totalorder %s321, %s322
      %p334 = scmp.eq.s32.totalorder %s29, 1
      %p335 = por %p333, %p334
      %p337 = scmp.ne.s32.totalorder %s322, %s336
      %p338 = scmp.eq.s32.totalorder %s29, 0
      %p339 = por %p337, %p338
      %s341 = sadd.s32 %s340, 1
      %p344 = scmp.eq.s32.totalorder %s23, 1
      %p345 = scmp.ne.s32.totalorder %s340, %s342
      %p346 = scmp.eq.s32.totalorder %s23, 0
      %p347 = por %p345, %p346
      %p348 = scmp.ne.s32.totalorder %s340, %s342
      %p349 = scmp.eq.s32.totalorder %s28, 1
      %p350 = por %p348, %p349
      %p351 = scmp.ne.s32.totalorder %s342, %s343
      %p352 = scmp.eq.s32.totalorder %s28, 0
      %p353 = por %p351, %p352
      %p354 = scmp.ne.s32.totalorder %s342, %s343
      %p355 = scmp.eq.s32.totalorder %s29, 1
      %p356 = por %p354, %p355
      %p358 = scmp.ne.s32.totalorder %s343, %s357
      %p359 = scmp.eq.s32.totalorder %s29, 0
      %p360 = por %p358, %p359
      %s361 = ssub.s32 %s30, %s42
      %s362 = ssub.s32 %s31, %s38
      %s363 = sor.u32 %s361, %s362
      %p364 = scmp.eq.s32.totalorder %s363, 0
      %s366 = sadd.s32 %s365, 1
      %s367 = scalar_select %p364, %s365, %s366
      %p370 = pneg %p364
      %p371 = scmp.eq.s32.totalorder %s23, 1
      %p372 = por %p370, %p371
      %p373 = scmp.ne.s32.totalorder %s365, %s368
      %p374 = scmp.eq.s32.totalorder %s23, 0
      %p375 = por %p373, %p374
      %p376 = scmp.ne.s32.totalorder %s365, %s368
      %p377 = scmp.eq.s32.totalorder %s28, 1
      %p378 = por %p376, %p377
      %p379 = scmp.ne.s32.totalorder %s368, %s369
      %p380 = scmp.eq.s32.totalorder %s28, 0
      %p381 = por %p379, %p380
      %p382 = scmp.ne.s32.totalorder %s368, %s369
      %p383 = scmp.eq.s32.totalorder %s29, 1
      %p384 = por %p382, %p383
      %p386 = scmp.ne.s32.totalorder %s369, %s385
      %p387 = scmp.eq.s32.totalorder %s29, 0
      %p388 = por %p386, %p387
      %p389 = scmp.le.s32.totalorder 1, %s23
      %p390 = scmp.lt.s32.totalorder %s23, 3
      %p391 = pnand %p389, %p390
      %p392 = pneg %p391
      // Predicated region
      $region9: #{cross_attention_layer_bld.1} parent=5 // pred_check
        _
      $region10: #{cross_attention_layer_bld.1} parent=5 // pred_check_branch
        %394 = sbr.rel (%p391) target = $region12
      $region11: #{cross_attention_layer_bld.1} parent=5 // pred_region
        %s395 = ssub.s32 %s23, 1
        // Predicated region
        $region13: #{cross_attention_layer_bld.1} parent=11 // pred_check
          %p396 = pneg %p164
        $region14: #{cross_attention_layer_bld.1} parent=11 // pred_check_branch
          %398 = sbr.rel (%p396) target = $region16
        $region15: #{cross_attention_layer_bld.1} parent=11 // pred_region
          _
        $region16: #{cross_attention_layer_bld.1} parent=11 // pred_fallthru
          _
        // Predicated region
        $region17: #{cross_attention_layer_bld.1} parent=11 // pred_check
          %p399 = pneg %p185
        $region18: #{cross_attention_layer_bld.1} parent=11 // pred_check_branch
          %401 = sbr.rel (%p399) target = $region20
        $region19: #{cross_attention_layer_bld.1} parent=11 // pred_region
          _
        $region20: #{cross_attention_layer_bld.1} parent=11 // pred_fallthru
          _
        // Predicated region
        $region21: #{cross_attention_layer_bld.1} parent=11 // pred_check
          %p402 = pneg %p206
        $region22: #{cross_attention_layer_bld.1} parent=11 // pred_check_branch
          %404 = sbr.rel (%p402) target = $region24
        $region23: #{cross_attention_layer_bld.1} parent=11 // pred_region
          _
        $region24: #{cross_attention_layer_bld.1} parent=11 // pred_fallthru
          _
        // Predicated region
        $region25: #{cross_attention_layer_bld.1} parent=11 // pred_check
          %p405 = pneg %p227
        $region26: #{cross_attention_layer_bld.1} parent=11 // pred_check_branch
          %407 = sbr.rel (%p405) target = $region28
        $region27: #{cross_attention_layer_bld.1} parent=11 // pred_region
          _
        $region28: #{cross_attention_layer_bld.1} parent=11 // pred_fallthru
          _
        // Predicated region
        $region29: #{cross_attention_layer_bld.1} parent=11 // pred_check
          %p408 = pneg %p248
        $region30: #{cross_attention_layer_bld.1} parent=11 // pred_check_branch
          %410 = sbr.rel (%p408) target = $region32
        $region31: #{cross_attention_layer_bld.1} parent=11 // pred_region
          _
        $region32: #{cross_attention_layer_bld.1} parent=11 // pred_fallthru
          _
        // Predicated region
        $region33: #{cross_attention_layer_bld.1} parent=11 // pred_check
          %p411 = pneg %p269
        $region34: #{cross_attention_layer_bld.1} parent=11 // pred_check_branch
          %413 = sbr.rel (%p411) target = $region36
        $region35: #{cross_attention_layer_bld.1} parent=11 // pred_region
          _
        $region36: #{cross_attention_layer_bld.1} parent=11 // pred_fallthru
          _
        // Predicated region
        $region37: #{cross_attention_layer_bld.1} parent=11 // pred_check
          %p414 = pneg %p290
        $region38: #{cross_attention_layer_bld.1} parent=11 // pred_check_branch
          %416 = sbr.rel (%p414) target = $region40
        $region39: #{cross_attention_layer_bld.1} parent=11 // pred_region
          _
        $region40: #{cross_attention_layer_bld.1} parent=11 // pred_fallthru
          _
        // Predicated region
        $region41: #{cross_attention_layer_bld.1} parent=11 // pred_check
          %p417 = pneg %p311
        $region42: #{cross_attention_layer_bld.1} parent=11 // pred_check_branch
          %419 = sbr.rel (%p417) target = $region44
        $region43: #{cross_attention_layer_bld.1} parent=11 // pred_region
          _
        $region44: #{cross_attention_layer_bld.1} parent=11 // pred_fallthru
          _
        // Predicated region
        $region45: #{cross_attention_layer_bld.1} parent=11 // pred_check
          %p420 = pneg %p332
        $region46: #{cross_attention_layer_bld.1} parent=11 // pred_check_branch
          %422 = sbr.rel (%p420) target = $region48
        $region47: #{cross_attention_layer_bld.1} parent=11 // pred_region
          _
        $region48: #{cross_attention_layer_bld.1} parent=11 // pred_fallthru
          _
        // Predicated region
        $region49: #{cross_attention_layer_bld.1} parent=11 // pred_check
          %p423 = pneg %p353
        $region50: #{cross_attention_layer_bld.1} parent=11 // pred_check_branch
          %425 = sbr.rel (%p423) target = $region52
        $region51: #{cross_attention_layer_bld.1} parent=11 // pred_region
          _
        $region52: #{cross_attention_layer_bld.1} parent=11 // pred_fallthru
          _
      $region12: #{cross_attention_layer_bld.1} parent=5 // pred_fallthru
        _
      %p426 = scmp.lt.s32.totalorder %s23, 2
      // Predicated region
      $region53: #{cross_attention_layer_bld.1} parent=5 // pred_check
        %p427 = pneg %p426
      $region54: #{cross_attention_layer_bld.1} parent=5 // pred_check_branch
        %429 = sbr.rel (%p427) target = $region56
      $region55: #{cross_attention_layer_bld.1} parent=5 // pred_region
        // Predicated region
        $region57: #{cross_attention_layer_bld.1} parent=55 // pred_check
          %p430 = pneg %p57
        $region58: #{cross_attention_layer_bld.1} parent=55 // pred_check_branch
          %432 = sbr.rel (%p430) target = $region60
        $region59: #{cross_attention_layer_bld.1} parent=55 // pred_region
          %p433 = scmp.lt.s32.totalorder %s30, 1
          %s434 = scalar_select %p433, %s30, 1
          %p435 = scmp.lt.s32.totalorder %s31, 0
          %s436 = scalar_select %p435, %s31, 0
          %s437 = sadd.s32 %s436, %s434
          %s438 = smul.addr %s437, 8
          %s439 = scalar_lea.vmem %s0, %s438
        $region60: #{cross_attention_layer_bld.1} parent=55 // pred_fallthru
          _
        // Predicated region
        $region61: #{cross_attention_layer_bld.1} parent=55 // pred_check
          %p440 = pneg %p83
        $region62: #{cross_attention_layer_bld.1} parent=55 // pred_check_branch
          %442 = sbr.rel (%p440) target = $region64
        $region63: #{cross_attention_layer_bld.1} parent=55 // pred_region
          %p443 = scmp.lt.s32.totalorder %s30, 1
          %s444 = scalar_select %p443, %s30, 1
          %s445 = smul.addr %s444, 2
          %s446 = smul.addr %s445, 4
          %s447 = scalar_lea.vmem %s1, %s446
        $region64: #{cross_attention_layer_bld.1} parent=55 // pred_fallthru
          _
        // Predicated region
        $region65: #{cross_attention_layer_bld.1} parent=55 // pred_check
          %p448 = pneg %p111
        $region66: #{cross_attention_layer_bld.1} parent=55 // pred_check_branch
          %450 = sbr.rel (%p448) target = $region68
        $region67: #{cross_attention_layer_bld.1} parent=55 // pred_region
          %p451 = scmp.lt.s32.totalorder %s30, 1
          %s452 = scalar_select %p451, %s30, 1
          %p453 = scmp.lt.s32.totalorder %s31, 0
          %s454 = scalar_select %p453, %s31, 0
          %s455 = sadd.s32 %s454, %s452
          %s456 = smul.addr %s455, 4
          %s457 = scalar_lea.vmem %s2, %s456
        $region68: #{cross_attention_layer_bld.1} parent=55 // pred_fallthru
          _
        // Predicated region
        $region69: #{cross_attention_layer_bld.1} parent=55 // pred_check
          %p458 = pneg %p137
        $region70: #{cross_attention_layer_bld.1} parent=55 // pred_check_branch
          %460 = sbr.rel (%p458) target = $region72
        $region71: #{cross_attention_layer_bld.1} parent=55 // pred_region
          %p461 = scmp.lt.s32.totalorder %s30, 1
          %s462 = scalar_select %p461, %s30, 1
          %s463 = smul.addr %s462, 2
          %s464 = smul.addr %s463, 4
          %s465 = scalar_lea.vmem %s3, %s464
        $region72: #{cross_attention_layer_bld.1} parent=55 // pred_fallthru
          _
      $region56: #{cross_attention_layer_bld.1} parent=5 // pred_fallthru
        _
      %p466 = scmp.le.s32.totalorder 1, %s23
      %p467 = scmp.lt.s32.totalorder %s23, 3
      %p468 = pnand %p466, %p467
      %p469 = pneg %p468
      // Predicated region
      $region73: #{cross_attention_layer_bld.1} parent=5 // pred_check
        _
      $region74: #{cross_attention_layer_bld.1} parent=5 // pred_check_branch
        %471 = sbr.rel (%p468) target = $region76
      $region75: #{cross_attention_layer_bld.1} parent=5 // pred_region
        %s472 = ssub.s32 %s23, 1
        %p473 = scmp.lt.s32.totalorder %s32, 1
        %s474 = scalar_select %p473, %s32, 1
        %p475 = scmp.lt.s32.totalorder %s33, 0
        %s476 = scalar_select %p475, %s33, 0
        %s477 = sadd.s32 %s476, %s474
        %s478 = smul.addr %s477, 8
        %s479 = scalar_lea.vmem %s0, %s478
        %p480 = pneg %p63
        %p481 = pneg %p60
        %p482 = scmp.lt.s32.totalorder %s32, 1
        %s483 = scalar_select %p482, %s32, 1
        %s484 = smul.addr %s483, 2
        %s485 = smul.addr %s484, 4
        %s486 = scalar_lea.vmem %s1, %s485
        %p487 = pneg %p89
        %p488 = pneg %p86
        %p489 = scmp.lt.s32.totalorder %s32, 1
        %s490 = scalar_select %p489, %s32, 1
        %p491 = scmp.lt.s32.totalorder %s33, 0
        %s492 = scalar_select %p491, %s33, 0
        %s493 = sadd.s32 %s492, %s490
        %s494 = smul.addr %s493, 4
        %s495 = scalar_lea.vmem %s2, %s494
        %p496 = pneg %p117
        %p497 = pneg %p114
        %p498 = scmp.lt.s32.totalorder %s32, 1
        %s499 = scalar_select %p498, %s32, 1
        %s500 = smul.addr %s499, 2
        %s501 = smul.addr %s500, 4
        %s502 = scalar_lea.vmem %s3, %s501
        %p503 = pneg %p143
        %p504 = pneg %p140
        %p505 = pneg %p164
        %p506 = pneg %p161
        %p507 = pneg %p185
        %p508 = pneg %p182
        %p509 = pneg %p206
        %p510 = pneg %p203
        %p511 = pneg %p227
        %p512 = pneg %p224
        %p513 = pneg %p248
        %p514 = pneg %p245
        %p515 = pneg %p269
        %p516 = pneg %p266
        %p517 = pneg %p290
        %p518 = pneg %p287
        %p519 = pneg %p311
        %p520 = pneg %p308
        %p521 = pneg %p332
        %p522 = pneg %p329
        %p523 = pneg %p353
        %p524 = pneg %p350
        %p525 = pneg %p381
        %p526 = pneg %p378
        %s527 = sand.u32 %s368, 1
        %s528 = scalar_lea.sflag [#allocation5], %s527
        %s529 = sand.u32 %s368, 1
        %s530 = smul.addr %s529, 8
        %s531 = scalar_lea.vmem [#allocation4], %s530
        %p532 = scmp.lt.s32.totalorder %s32, 1
        %s533 = scalar_select %p532, %s32, 1
        %p534 = scmp.lt.s32.totalorder %s33, 0
        %s535 = scalar_select %p534, %s33, 0
        %s536 = sadd.s32 %s535, %s533
        %s537 = smul.addr %s536, 8
        %s538 = scalar_lea.vmem %s0, %s537
        %p539 = scmp.lt.s32.totalorder %s32, 1
        %s540 = scalar_select %p539, %s32, 1
        %s541 = smul.addr %s540, 2
        %s542 = smul.addr %s541, 4
        %s543 = scalar_lea.vmem %s1, %s542
        %p544 = scmp.lt.s32.totalorder %s32, 1
        %s545 = scalar_select %p544, %s32, 1
        %p546 = scmp.lt.s32.totalorder %s33, 0
        %s547 = scalar_select %p546, %s33, 0
        %s548 = sadd.s32 %s547, %s545
        %s549 = smul.addr %s548, 4
        %s550 = scalar_lea.vmem %s2, %s549
        %p551 = scmp.lt.s32.totalorder %s32, 1
        %s552 = scalar_select %p551, %s32, 1
        %s553 = smul.addr %s552, 2
        %s554 = smul.addr %s553, 4
        %s555 = scalar_lea.vmem %s3, %s554
        %p557 = scmp.eq.s32.totalorder %s33, 0
        // Predicated region
        $region77: #{cross_attention_layer_bld.1} parent=75 // pred_check
          %p558 = pneg %p557
        $region78: #{cross_attention_layer_bld.1} parent=75 // pred_check_branch
          %560 = sbr.rel (%p558) target = $region80
        $region79: #{cross_attention_layer_bld.1} parent=75 // pred_region
          %v561 = vld [vmem:[%s543] sm:$0xf]
          %v562 = vld [vmem:[%s543 + $0x4] sm:$0xf]
          %v563 = vld [vmem:[%s555] sm:$0xf]
          %v564 = vld [vmem:[%s555 + $0x4] sm:$0xf]
          %v565 = vadd.bf16 %v561, %v563
          %v566 = vadd.bf16 %v562, %v564
          %v567 = vld [vmem:[%s5] sm:$0xf]
          %v568 = vld [vmem:[%s5 + $0x4] sm:$0xf]
          %v569 = vld [vmem:[%s5 + $0x8] sm:$0xf]
          %v570 = vld [vmem:[%s5 + $0xc] sm:$0xf]
          %v571 = vld [vmem:[%s9] sm:$0x1]
          %v573 = vlaneseq
          %v574 = vshrl.u32 %v573, 7
          %v575 = vsub.s32 0, %v574
          %v576 = vrot.slane %v571, %v575
          %v580 = vunpack.c.l.b16 %v565
          %v581 = vunpack.c.l.b16 %v566
          %v582 = vpack.c.b16 %v581, %v580
          %v587 = vunpack.c.l.b16 %v567
          %v588 = vunpack.c.l.b16 %v568
          %v589 = vunpack.c.l.b16 %v569
          %v590 = vunpack.c.l.b16 %v570
          %v591 = vpack.c.b16 %v588, %v587
          %v592 = vpack.c.b16 %v590, %v589
          %vm595 = vcmask 261120
          %v597 = vsel %vm595, %v582, 0
          %599 = vmatprep.subr.bf16.mxu0 0
          %600 = vmatpush1.bf16.msra.mxu0 %v591
          %601 = vmatprep.subr.bf16.mxu0 0
          %602 = vmatpush1.bf16.msra.mxu0 %v592
          %603 = vmatprep.subr.bf16.mxu0 0
          %604 = vmatpush1.bf16.msra.mxu0 0
          %605 = vmatprep.subr.bf16.mxu0 0
          %606 = vmatpush1.bf16.msra.mxu0 0
          %607 = vmatprep.subr.bf16.mxu0 0
          %608 = vmatpush1.bf16.msra.mxu0 0
          %609 = vmatprep.subr.bf16.mxu0 0
          %610 = vmatpush1.bf16.msra.mxu0 0
          %611 = vmatprep.subr.bf16.mxu0 0
          %612 = vmatpush1.bf16.msra.mxu0 0
          %613 = vmatprep.subr.bf16.mxu0 0
          %614 = vmatpush1.bf16.msra.mxu0 0
          %615 = vmatprep.subr.bf16.mxu0 0
          %616 = vmatpush1.bf16.msra.mxu0 0
          %617 = vmatprep.subr.bf16.mxu0 0
          %618 = vmatpush1.bf16.msra.mxu0 0
          %619 = vmatprep.subr.bf16.mxu0 0
          %620 = vmatpush1.bf16.msra.mxu0 0
          %621 = vmatprep.subr.bf16.mxu0 0
          %622 = vmatpush1.bf16.msra.mxu0 0
          %623 = vmatprep.subr.bf16.mxu0 0
          %624 = vmatpush1.bf16.msra.mxu0 0
          %625 = vmatprep.subr.bf16.mxu0 0
          %626 = vmatpush1.bf16.msra.mxu0 0
          %627 = vmatprep.subr.bf16.mxu0 0
          %628 = vmatpush1.bf16.msra.mxu0 0
          %629 = vmatprep.subr.bf16.mxu0 0
          %630 = vmatpush1.bf16.msra.mxu0 0
          %631 = vmatprep.mubr.bf16.mxu0 0
          %632 = vmatmul.mubr.bf16.gmra.mrb[0].mxu0 %v597
          %v633 = vpop.f32.mrb[0].mxu0
          %v634 = vadd.f32 %v576, %v633
          %v635 = vpop.f32.mrb[0].mxu0
          %v636 = vpop.f32.mrb[0].mxu0
          %v637 = vadd.f32 %v576, %v636
          %v638 = vpop.f32.mrb[0].mxu0
          %639 = vdwg.mxu0
          %v640 = vld [vmem:[%s6] sm:$0xf]
          %v641 = vld [vmem:[%s6 + $0x4] sm:$0xf]
          %v642 = vld [vmem:[%s6 + $0x8] sm:$0xf]
          %v643 = vld [vmem:[%s6 + $0xc] sm:$0xf]
          %v644 = vld [vmem:[%s10] sm:$0x1]
          %v646 = vlaneseq
          %v647 = vshrl.u32 %v646, 7
          %v648 = vsub.s32 0, %v647
          %v649 = vrot.slane %v644, %v648
          %v653 = vunpack.c.l.b16 %v561
          %v654 = vunpack.c.l.b16 %v562
          %v655 = vpack.c.b16 %v654, %v653
          %v660 = vunpack.c.l.b16 %v640
          %v661 = vunpack.c.l.b16 %v641
          %v662 = vunpack.c.l.b16 %v642
          %v663 = vunpack.c.l.b16 %v643
          %v664 = vpack.c.b16 %v661, %v660
          %v665 = vpack.c.b16 %v663, %v662
          %v669 = vsel %vm595, %v655, 0
          %671 = vmatprep.subr.bf16.mxu0 0
          %672 = vmatpush1.bf16.msra.mxu0 %v664
          %673 = vmatprep.subr.bf16.mxu0 0
          %674 = vmatpush1.bf16.msra.mxu0 %v665
          %675 = vmatprep.subr.bf16.mxu0 0
          %676 = vmatpush1.bf16.msra.mxu0 0
          %677 = vmatprep.subr.bf16.mxu0 0
          %678 = vmatpush1.bf16.msra.mxu0 0
          %679 = vmatprep.subr.bf16.mxu0 0
          %680 = vmatpush1.bf16.msra.mxu0 0
          %681 = vmatprep.subr.bf16.mxu0 0
          %682 = vmatpush1.bf16.msra.mxu0 0
          %683 = vmatprep.subr.bf16.mxu0 0
          %684 = vmatpush1.bf16.msra.mxu0 0
          %685 = vmatprep.subr.bf16.mxu0 0
          %686 = vmatpush1.bf16.msra.mxu0 0
          %687 = vmatprep.subr.bf16.mxu0 0
          %688 = vmatpush1.bf16.msra.mxu0 0
          %689 = vmatprep.subr.bf16.mxu0 0
          %690 = vmatpush1.bf16.msra.mxu0 0
          %691 = vmatprep.subr.bf16.mxu0 0
          %692 = vmatpush1.bf16.msra.mxu0 0
          %693 = vmatprep.subr.bf16.mxu0 0
          %694 = vmatpush1.bf16.msra.mxu0 0
          %695 = vmatprep.subr.bf16.mxu0 0
          %696 = vmatpush1.bf16.msra.mxu0 0
          %697 = vmatprep.subr.bf16.mxu0 0
          %698 = vmatpush1.bf16.msra.mxu0 0
          %699 = vmatprep.subr.bf16.mxu0 0
          %700 = vmatpush1.bf16.msra.mxu0 0
          %701 = vmatprep.subr.bf16.mxu0 0
          %702 = vmatpush1.bf16.msra.mxu0 0
          %703 = vmatprep.mubr.bf16.mxu0 0
          %704 = vmatmul.mubr.bf16.gmra.mrb[0].mxu0 %v669
          %v705 = vpop.f32.mrb[0].mxu0
          %v706 = vadd.f32 %v649, %v705
          %v707 = vpop.f32.mrb[0].mxu0
          %v708 = vpop.f32.mrb[0].mxu0
          %v709 = vadd.f32 %v649, %v708
          %v710 = vpop.f32.mrb[0].mxu0
          %711 = vdwg.mxu0
          %v712 = vpack.c.bf16 %v637, %v634
          %714 = vrot.lane.b32.xlu0 %v712, 120
          %v715 = vpop.permute.xlu0 %714
          %716 = vrot.lane.b32.xlu0 %v712, 112
          %v717 = vpop.permute.xlu0 %716
          %718 = vrot.lane.b32.xlu0 %v712, 104
          %v719 = vpop.permute.xlu0 %718
          %v722 = vpack.i.b16 %v715, %v712
          %v724 = vshrl.u32 %v712, 16
          %v725 = vshrl.u32 %v715, 16
          %v726 = vpack.i.b16 %v725, %v724
          %v730 = vpack.i.b16 %v719, %v717
          %v732 = vshrl.u32 %v717, 16
          %v733 = vshrl.u32 %v719, 16
          %v734 = vpack.i.b16 %v733, %v732
          %v737 = vpack.i.b16 0, 0
          %v739 = vshrl.u32 0, 16
          %v740 = vpack.i.b16 %v739, %v739
          %v742 = vcombine.high %v722, %v737
          %v744 = vunpack.c.l.s4 1983009808
          %v745 = vunpack.c.0.s8 %v744
          %v746 = vlaneseq
          %v747 = vshrl.u32 %v746, 7
          %v748 = vsub.s32 %v745, %v747
          %v749 = vrot.slane %v722, %v748
          %v751 = vunpack.c.l.s4 1983009808
          %v752 = vunpack.c.0.s8 %v751
          %v753 = vlaneseq
          %v754 = vshrl.u32 %v753, 7
          %v755 = vsub.s32 %v752, %v754
          %v756 = vrot.slane %v742, %v755
          %v757 = vcombine.high %v730, %v737
          %v759 = vunpack.c.l.s4 1983009808
          %v760 = vunpack.c.0.s8 %v759
          %v761 = vlaneseq
          %v762 = vshrl.u32 %v761, 7
          %v763 = vsub.s32 %v760, %v762
          %v764 = vrot.slane %v730, %v763
          %v766 = vunpack.c.l.s4 1983009808
          %v767 = vunpack.c.0.s8 %v766
          %v768 = vlaneseq
          %v769 = vshrl.u32 %v768, 7
          %v770 = vsub.s32 %v767, %v769
          %v771 = vrot.slane %v757, %v770
          %v772 = vcombine.low %v749, %v764
          %v773 = vcombine.high %v749, %v764
          %v775 = vunpack.c.l.s4 1934713408
          %v776 = vunpack.c.0.s8 %v775
          %v777 = vlaneseq
          %v778 = vshrl.u32 %v777, 7
          %v779 = vsub.s32 %v776, %v778
          %v780 = vrot.slane %v772, %v779
          %v782 = vunpack.c.l.s4 1934713408
          %v783 = vunpack.c.0.s8 %v782
          %v784 = vlaneseq
          %v785 = vshrl.u32 %v784, 7
          %v786 = vsub.s32 %v783, %v785
          %v787 = vrot.slane %v773, %v786
          %v788 = vcombine.low %v756, %v771
          %v789 = vcombine.high %v756, %v771
          %v791 = vunpack.c.l.s4 1934713408
          %v792 = vunpack.c.0.s8 %v791
          %v793 = vlaneseq
          %v794 = vshrl.u32 %v793, 7
          %v795 = vsub.s32 %v792, %v794
          %v796 = vrot.slane %v788, %v795
          %v798 = vunpack.c.l.s4 1934713408
          %v799 = vunpack.c.0.s8 %v798
          %v800 = vlaneseq
          %v801 = vshrl.u32 %v800, 7
          %v802 = vsub.s32 %v799, %v801
          %v803 = vrot.slane %v789, %v802
          %v804 = vcombine.high %v780, 0
          %v805 = vcombine.high %v787, 0
          %v806 = vcombine.high %v796, 0
          %v807 = vcombine.high %v803, 0
          %v808 = vcombine.high %v726, %v740
          %v810 = vunpack.c.l.s4 1983009808
          %v811 = vunpack.c.0.s8 %v810
          %v812 = vlaneseq
          %v813 = vshrl.u32 %v812, 7
          %v814 = vsub.s32 %v811, %v813
          %v815 = vrot.slane %v726, %v814
          %v817 = vunpack.c.l.s4 1983009808
          %v818 = vunpack.c.0.s8 %v817
          %v819 = vlaneseq
          %v820 = vshrl.u32 %v819, 7
          %v821 = vsub.s32 %v818, %v820
          %v822 = vrot.slane %v808, %v821
          %v823 = vcombine.high %v734, %v740
          %v825 = vunpack.c.l.s4 1983009808
          %v826 = vunpack.c.0.s8 %v825
          %v827 = vlaneseq
          %v828 = vshrl.u32 %v827, 7
          %v829 = vsub.s32 %v826, %v828
          %v830 = vrot.slane %v734, %v829
          %v832 = vunpack.c.l.s4 1983009808
          %v833 = vunpack.c.0.s8 %v832
          %v834 = vlaneseq
          %v835 = vshrl.u32 %v834, 7
          %v836 = vsub.s32 %v833, %v835
          %v837 = vrot.slane %v823, %v836
          %v838 = vcombine.low %v815, %v830
          %v839 = vcombine.high %v815, %v830
          %v841 = vunpack.c.l.s4 1934713408
          %v842 = vunpack.c.0.s8 %v841
          %v843 = vlaneseq
          %v844 = vshrl.u32 %v843, 7
          %v845 = vsub.s32 %v842, %v844
          %v846 = vrot.slane %v838, %v845
          %v848 = vunpack.c.l.s4 1934713408
          %v849 = vunpack.c.0.s8 %v848
          %v850 = vlaneseq
          %v851 = vshrl.u32 %v850, 7
          %v852 = vsub.s32 %v849, %v851
          %v853 = vrot.slane %v839, %v852
          %v854 = vcombine.low %v822, %v837
          %v855 = vcombine.high %v822, %v837
          %v857 = vunpack.c.l.s4 1934713408
          %v858 = vunpack.c.0.s8 %v857
          %v859 = vlaneseq
          %v860 = vshrl.u32 %v859, 7
          %v861 = vsub.s32 %v858, %v860
          %v862 = vrot.slane %v854, %v861
          %v864 = vunpack.c.l.s4 1934713408
          %v865 = vunpack.c.0.s8 %v864
          %v866 = vlaneseq
          %v867 = vshrl.u32 %v866, 7
          %v868 = vsub.s32 %v865, %v867
          %v869 = vrot.slane %v855, %v868
          %v870 = vcombine.high %v846, 0
          %v871 = vcombine.high %v853, 0
          %v872 = vcombine.high %v862, 0
          %v873 = vcombine.high %v869, 0
          %v874 = vcombine.low %v780, %v787
          %v876 = vunpack.c.l.s4 1983009808
          %v877 = vunpack.c.0.s8 %v876
          %v878 = vlaneseq
          %v879 = vshrl.u32 %v878, 7
          %v880 = vsub.s32 %v877, %v879
          %v881 = vrot.slane %v874, %v880
          %v882 = vcombine.low %v804, %v805
          %v884 = vunpack.c.l.s4 1983009808
          %v885 = vunpack.c.0.s8 %v884
          %v886 = vlaneseq
          %v887 = vshrl.u32 %v886, 7
          %v888 = vsub.s32 %v885, %v887
          %v889 = vrot.slane %v882, %v888
          %v890 = vcombine.low %v796, %v803
          %v892 = vunpack.c.l.s4 1983009808
          %v893 = vunpack.c.0.s8 %v892
          %v894 = vlaneseq
          %v895 = vshrl.u32 %v894, 7
          %v896 = vsub.s32 %v893, %v895
          %v897 = vrot.slane %v890, %v896
          %v898 = vcombine.low %v806, %v807
          %v900 = vunpack.c.l.s4 1983009808
          %v901 = vunpack.c.0.s8 %v900
          %v902 = vlaneseq
          %v903 = vshrl.u32 %v902, 7
          %v904 = vsub.s32 %v901, %v903
          %v905 = vrot.slane %v898, %v904
          %v906 = vcombine.low %v881, %v889
          %v908 = vunpack.c.l.s4 1934713408
          %v909 = vunpack.c.0.s8 %v908
          %v910 = vlaneseq
          %v911 = vshrl.u32 %v910, 7
          %v912 = vsub.s32 %v909, %v911
          %v913 = vrot.slane %v906, %v912
          %v914 = vcombine.low %v897, %v905
          %v916 = vunpack.c.l.s4 1934713408
          %v917 = vunpack.c.0.s8 %v916
          %v918 = vlaneseq
          %v919 = vshrl.u32 %v918, 7
          %v920 = vsub.s32 %v917, %v919
          %v921 = vrot.slane %v914, %v920
          %v922 = vcombine.low %v913, %v921
          %v923 = vcombine.high %v913, %v921
          %v924 = vcombine.low %v846, %v853
          %v926 = vunpack.c.l.s4 1983009808
          %v927 = vunpack.c.0.s8 %v926
          %v928 = vlaneseq
          %v929 = vshrl.u32 %v928, 7
          %v930 = vsub.s32 %v927, %v929
          %v931 = vrot.slane %v924, %v930
          %v932 = vcombine.low %v870, %v871
          %v934 = vunpack.c.l.s4 1983009808
          %v935 = vunpack.c.0.s8 %v934
          %v936 = vlaneseq
          %v937 = vshrl.u32 %v936, 7
          %v938 = vsub.s32 %v935, %v937
          %v939 = vrot.slane %v932, %v938
          %v940 = vcombine.low %v862, %v869
          %v942 = vunpack.c.l.s4 1983009808
          %v943 = vunpack.c.0.s8 %v942
          %v944 = vlaneseq
          %v945 = vshrl.u32 %v944, 7
          %v946 = vsub.s32 %v943, %v945
          %v947 = vrot.slane %v940, %v946
          %v948 = vcombine.low %v872, %v873
          %v950 = vunpack.c.l.s4 1983009808
          %v951 = vunpack.c.0.s8 %v950
          %v952 = vlaneseq
          %v953 = vshrl.u32 %v952, 7
          %v954 = vsub.s32 %v951, %v953
          %v955 = vrot.slane %v948, %v954
          %v956 = vcombine.low %v931, %v939
          %v958 = vunpack.c.l.s4 1934713408
          %v959 = vunpack.c.0.s8 %v958
          %v960 = vlaneseq
          %v961 = vshrl.u32 %v960, 7
          %v962 = vsub.s32 %v959, %v961
          %v963 = vrot.slane %v956, %v962
          %v964 = vcombine.low %v947, %v955
          %v966 = vunpack.c.l.s4 1934713408
          %v967 = vunpack.c.0.s8 %v966
          %v968 = vlaneseq
          %v969 = vshrl.u32 %v968, 7
          %v970 = vsub.s32 %v967, %v969
          %v971 = vrot.slane %v964, %v970
          %v972 = vcombine.low %v963, %v971
          %v973 = vcombine.high %v963, %v971
          %v976 = vpack.i.b16 %v972, %v922
          %v978 = vshrl.u32 %v922, 16
          %v979 = vshrl.u32 %v972, 16
          %v980 = vpack.i.b16 %v979, %v978
          %v984 = vpack.i.b16 %v973, %v923
          %v986 = vshrl.u32 %v923, 16
          %v987 = vshrl.u32 %v973, 16
          %v988 = vpack.i.b16 %v987, %v986
          %v990 = vpack.c.bf16 %v709, %v706
          %992 = vrot.lane.b32.xlu0 %v990, 120
          %v993 = vpop.permute.xlu0 %992
          %994 = vrot.lane.b32.xlu0 %v990, 112
          %v995 = vpop.permute.xlu0 %994
          %996 = vrot.lane.b32.xlu0 %v990, 104
          %v997 = vpop.permute.xlu0 %996
          %v1000 = vpack.i.b16 %v993, %v990
          %v1002 = vshrl.u32 %v990, 16
          %v1003 = vshrl.u32 %v993, 16
          %v1004 = vpack.i.b16 %v1003, %v1002
          %v1008 = vpack.i.b16 %v997, %v995
          %v1010 = vshrl.u32 %v995, 16
          %v1011 = vshrl.u32 %v997, 16
          %v1012 = vpack.i.b16 %v1011, %v1010
          %v1014 = vcombine.high %v1000, %v737
          %v1016 = vunpack.c.l.s4 1983009808
          %v1017 = vunpack.c.0.s8 %v1016
          %v1018 = vlaneseq
          %v1019 = vshrl.u32 %v1018, 7
          %v1020 = vsub.s32 %v1017, %v1019
          %v1021 = vrot.slane %v1000, %v1020
          %v1023 = vunpack.c.l.s4 1983009808
          %v1024 = vunpack.c.0.s8 %v1023
          %v1025 = vlaneseq
          %v1026 = vshrl.u32 %v1025, 7
          %v1027 = vsub.s32 %v1024, %v1026
          %v1028 = vrot.slane %v1014, %v1027
          %v1029 = vcombine.high %v1008, %v737
          %v1031 = vunpack.c.l.s4 1983009808
          %v1032 = vunpack.c.0.s8 %v1031
          %v1033 = vlaneseq
          %v1034 = vshrl.u32 %v1033, 7
          %v1035 = vsub.s32 %v1032, %v1034
          %v1036 = vrot.slane %v1008, %v1035
          %v1038 = vunpack.c.l.s4 1983009808
          %v1039 = vunpack.c.0.s8 %v1038
          %v1040 = vlaneseq
          %v1041 = vshrl.u32 %v1040, 7
          %v1042 = vsub.s32 %v1039, %v1041
          %v1043 = vrot.slane %v1029, %v1042
          %v1044 = vcombine.low %v1021, %v1036
          %v1045 = vcombine.high %v1021, %v1036
          %v1047 = vunpack.c.l.s4 1934713408
          %v1048 = vunpack.c.0.s8 %v1047
          %v1049 = vlaneseq
          %v1050 = vshrl.u32 %v1049, 7
          %v1051 = vsub.s32 %v1048, %v1050
          %v1052 = vrot.slane %v1044, %v1051
          %v1054 = vunpack.c.l.s4 1934713408
          %v1055 = vunpack.c.0.s8 %v1054
          %v1056 = vlaneseq
          %v1057 = vshrl.u32 %v1056, 7
          %v1058 = vsub.s32 %v1055, %v1057
          %v1059 = vrot.slane %v1045, %v1058
          %v1060 = vcombine.low %v1028, %v1043
          %v1061 = vcombine.high %v1028, %v1043
          %v1063 = vunpack.c.l.s4 1934713408
          %v1064 = vunpack.c.0.s8 %v1063
          %v1065 = vlaneseq
          %v1066 = vshrl.u32 %v1065, 7
          %v1067 = vsub.s32 %v1064, %v1066
          %v1068 = vrot.slane %v1060, %v1067
          %v1070 = vunpack.c.l.s4 1934713408
          %v1071 = vunpack.c.0.s8 %v1070
          %v1072 = vlaneseq
          %v1073 = vshrl.u32 %v1072, 7
          %v1074 = vsub.s32 %v1071, %v1073
          %v1075 = vrot.slane %v1061, %v1074
          %v1076 = vcombine.high %v1052, 0
          %v1077 = vcombine.high %v1059, 0
          %v1078 = vcombine.high %v1068, 0
          %v1079 = vcombine.high %v1075, 0
          %v1080 = vcombine.high %v1004, %v740
          %v1082 = vunpack.c.l.s4 1983009808
          %v1083 = vunpack.c.0.s8 %v1082
          %v1084 = vlaneseq
          %v1085 = vshrl.u32 %v1084, 7
          %v1086 = vsub.s32 %v1083, %v1085
          %v1087 = vrot.slane %v1004, %v1086
          %v1089 = vunpack.c.l.s4 1983009808
          %v1090 = vunpack.c.0.s8 %v1089
          %v1091 = vlaneseq
          %v1092 = vshrl.u32 %v1091, 7
          %v1093 = vsub.s32 %v1090, %v1092
          %v1094 = vrot.slane %v1080, %v1093
          %v1095 = vcombine.high %v1012, %v740
          %v1097 = vunpack.c.l.s4 1983009808
          %v1098 = vunpack.c.0.s8 %v1097
          %v1099 = vlaneseq
          %v1100 = vshrl.u32 %v1099, 7
          %v1101 = vsub.s32 %v1098, %v1100
          %v1102 = vrot.slane %v1012, %v1101
          %v1104 = vunpack.c.l.s4 1983009808
          %v1105 = vunpack.c.0.s8 %v1104
          %v1106 = vlaneseq
          %v1107 = vshrl.u32 %v1106, 7
          %v1108 = vsub.s32 %v1105, %v1107
          %v1109 = vrot.slane %v1095, %v1108
          %v1110 = vcombine.low %v1087, %v1102
          %v1111 = vcombine.high %v1087, %v1102
          %v1113 = vunpack.c.l.s4 1934713408
          %v1114 = vunpack.c.0.s8 %v1113
          %v1115 = vlaneseq
          %v1116 = vshrl.u32 %v1115, 7
          %v1117 = vsub.s32 %v1114, %v1116
          %v1118 = vrot.slane %v1110, %v1117
          %v1120 = vunpack.c.l.s4 1934713408
          %v1121 = vunpack.c.0.s8 %v1120
          %v1122 = vlaneseq
          %v1123 = vshrl.u32 %v1122, 7
          %v1124 = vsub.s32 %v1121, %v1123
          %v1125 = vrot.slane %v1111, %v1124
          %v1126 = vcombine.low %v1094, %v1109
          %v1127 = vcombine.high %v1094, %v1109
          %v1129 = vunpack.c.l.s4 1934713408
          %v1130 = vunpack.c.0.s8 %v1129
          %v1131 = vlaneseq
          %v1132 = vshrl.u32 %v1131, 7
          %v1133 = vsub.s32 %v1130, %v1132
          %v1134 = vrot.slane %v1126, %v1133
          %v1136 = vunpack.c.l.s4 1934713408
          %v1137 = vunpack.c.0.s8 %v1136
          %v1138 = vlaneseq
          %v1139 = vshrl.u32 %v1138, 7
          %v1140 = vsub.s32 %v1137, %v1139
          %v1141 = vrot.slane %v1127, %v1140
          %v1142 = vcombine.high %v1118, 0
          %v1143 = vcombine.high %v1125, 0
          %v1144 = vcombine.high %v1134, 0
          %v1145 = vcombine.high %v1141, 0
          %v1146 = vcombine.low %v1052, %v1059
          %v1148 = vunpack.c.l.s4 1983009808
          %v1149 = vunpack.c.0.s8 %v1148
          %v1150 = vlaneseq
          %v1151 = vshrl.u32 %v1150, 7
          %v1152 = vsub.s32 %v1149, %v1151
          %v1153 = vrot.slane %v1146, %v1152
          %v1154 = vcombine.low %v1076, %v1077
          %v1156 = vunpack.c.l.s4 1983009808
          %v1157 = vunpack.c.0.s8 %v1156
          %v1158 = vlaneseq
          %v1159 = vshrl.u32 %v1158, 7
          %v1160 = vsub.s32 %v1157, %v1159
          %v1161 = vrot.slane %v1154, %v1160
          %v1162 = vcombine.low %v1068, %v1075
          %v1164 = vunpack.c.l.s4 1983009808
          %v1165 = vunpack.c.0.s8 %v1164
          %v1166 = vlaneseq
          %v1167 = vshrl.u32 %v1166, 7
          %v1168 = vsub.s32 %v1165, %v1167
          %v1169 = vrot.slane %v1162, %v1168
          %v1170 = vcombine.low %v1078, %v1079
          %v1172 = vunpack.c.l.s4 1983009808
          %v1173 = vunpack.c.0.s8 %v1172
          %v1174 = vlaneseq
          %v1175 = vshrl.u32 %v1174, 7
          %v1176 = vsub.s32 %v1173, %v1175
          %v1177 = vrot.slane %v1170, %v1176
          %v1178 = vcombine.low %v1153, %v1161
          %v1180 = vunpack.c.l.s4 1934713408
          %v1181 = vunpack.c.0.s8 %v1180
          %v1182 = vlaneseq
          %v1183 = vshrl.u32 %v1182, 7
          %v1184 = vsub.s32 %v1181, %v1183
          %v1185 = vrot.slane %v1178, %v1184
          %v1186 = vcombine.low %v1169, %v1177
          %v1188 = vunpack.c.l.s4 1934713408
          %v1189 = vunpack.c.0.s8 %v1188
          %v1190 = vlaneseq
          %v1191 = vshrl.u32 %v1190, 7
          %v1192 = vsub.s32 %v1189, %v1191
          %v1193 = vrot.slane %v1186, %v1192
          %v1194 = vcombine.low %v1185, %v1193
          %v1195 = vcombine.high %v1185, %v1193
          %v1196 = vcombine.low %v1118, %v1125
          %v1198 = vunpack.c.l.s4 1983009808
          %v1199 = vunpack.c.0.s8 %v1198
          %v1200 = vlaneseq
          %v1201 = vshrl.u32 %v1200, 7
          %v1202 = vsub.s32 %v1199, %v1201
          %v1203 = vrot.slane %v1196, %v1202
          %v1204 = vcombine.low %v1142, %v1143
          %v1206 = vunpack.c.l.s4 1983009808
          %v1207 = vunpack.c.0.s8 %v1206
          %v1208 = vlaneseq
          %v1209 = vshrl.u32 %v1208, 7
          %v1210 = vsub.s32 %v1207, %v1209
          %v1211 = vrot.slane %v1204, %v1210
          %v1212 = vcombine.low %v1134, %v1141
          %v1214 = vunpack.c.l.s4 1983009808
          %v1215 = vunpack.c.0.s8 %v1214
          %v1216 = vlaneseq
          %v1217 = vshrl.u32 %v1216, 7
          %v1218 = vsub.s32 %v1215, %v1217
          %v1219 = vrot.slane %v1212, %v1218
          %v1220 = vcombine.low %v1144, %v1145
          %v1222 = vunpack.c.l.s4 1983009808
          %v1223 = vunpack.c.0.s8 %v1222
          %v1224 = vlaneseq
          %v1225 = vshrl.u32 %v1224, 7
          %v1226 = vsub.s32 %v1223, %v1225
          %v1227 = vrot.slane %v1220, %v1226
          %v1228 = vcombine.low %v1203, %v1211
          %v1230 = vunpack.c.l.s4 1934713408
          %v1231 = vunpack.c.0.s8 %v1230
          %v1232 = vlaneseq
          %v1233 = vshrl.u32 %v1232, 7
          %v1234 = vsub.s32 %v1231, %v1233
          %v1235 = vrot.slane %v1228, %v1234
          %v1236 = vcombine.low %v1219, %v1227
          %v1238 = vunpack.c.l.s4 1934713408
          %v1239 = vunpack.c.0.s8 %v1238
          %v1240 = vlaneseq
          %v1241 = vshrl.u32 %v1240, 7
          %v1242 = vsub.s32 %v1239, %v1241
          %v1243 = vrot.slane %v1236, %v1242
          %v1244 = vcombine.low %v1235, %v1243
          %v1245 = vcombine.high %v1235, %v1243
          %v1248 = vpack.i.b16 %v1244, %v1194
          %v1250 = vshrl.u32 %v1194, 16
          %v1251 = vshrl.u32 %v1244, 16
          %v1252 = vpack.i.b16 %v1251, %v1250
          %v1256 = vpack.i.b16 %v1245, %v1195
          %v1258 = vshrl.u32 %v1195, 16
          %v1259 = vshrl.u32 %v1245, 16
          %v1260 = vpack.i.b16 %v1259, %v1258
          %vm1262 = vcmask 64512
          %1263 = vst.msk [vmem:[#allocation2] sm:$0xff] %vm1262, %v976
          %1264 = vst.msk [vmem:[#allocation2 + $0x8] sm:$0xff] %vm1262, %v980
          %1265 = vst.msk [vmem:[#allocation2 + $0x10] sm:$0xff] %vm1262, %v984
          %1266 = vst.msk [vmem:[#allocation2 + $0x18] sm:$0xff] %vm1262, %v988
          %1267 = vst.msk [vmem:[#allocation3] sm:$0xff] %vm1262, %v1248
          %1268 = vst.msk [vmem:[#allocation3 + $0x8] sm:$0xff] %vm1262, %v1252
          %1269 = vst.msk [vmem:[#allocation3 + $0x10] sm:$0xff] %vm1262, %v1256
          %1270 = vst.msk [vmem:[#allocation3 + $0x18] sm:$0xff] %vm1262, %v1260
        $region80: #{cross_attention_layer_bld.1} parent=75 // pred_fallthru
          _
        %v1271 = vld [vmem:[#allocation2] sm:$0xff]
        %v1272 = vld [vmem:[#allocation2 + $0x8] sm:$0xff]
        %v1273 = vld [vmem:[#allocation2 + $0x10] sm:$0xff]
        %v1274 = vld [vmem:[#allocation2 + $0x18] sm:$0xff]
        %v1275 = vld [vmem:[#allocation3] sm:$0xff]
        %v1276 = vld [vmem:[#allocation3 + $0x8] sm:$0xff]
        %v1277 = vld [vmem:[#allocation3 + $0x10] sm:$0xff]
        %v1278 = vld [vmem:[#allocation3 + $0x18] sm:$0xff]
        %v1279 = vld [vmem:[%s538] sm:$0xff]
        %v1280 = vpack.c.bf16 %v1279, %v1279
        %v1281 = vld [vmem:[%s550] sm:$0xf]
        %v1282 = vadd.bf16 %v1280, %v1281
        %v1283 = vld [vmem:[%s4] sm:$0xf]
        %v1284 = vld [vmem:[%s4 + $0x4] sm:$0xf]
        %v1285 = vld [vmem:[%s4 + $0x8] sm:$0xf]
        %v1286 = vld [vmem:[%s4 + $0xc] sm:$0xf]
        %v1287 = vld [vmem:[%s8] sm:$0x1]
        %v1289 = vlaneseq
        %v1290 = vshrl.u32 %v1289, 7
        %v1291 = vsub.s32 0, %v1290
        %v1292 = vrot.slane %v1287, %v1291
        %v1298 = vunpack.c.l.b16 %v1283
        %v1299 = vunpack.c.l.b16 %v1284
        %v1300 = vunpack.c.l.b16 %v1285
        %v1301 = vunpack.c.l.b16 %v1286
        %v1302 = vpack.c.b16 %v1299, %v1298
        %v1303 = vpack.c.b16 %v1301, %v1300
        %vm1306 = vcmask 261120
        %v1308 = vsel %vm1306, %v1282, 0
        %1310 = vmatprep.subr.bf16.mxu0 0
        %1311 = vmatpush1.bf16.msra.mxu0 %v1302
        %1312 = vmatprep.subr.bf16.mxu0 0
        %1313 = vmatpush1.bf16.msra.mxu0 %v1303
        %1314 = vmatprep.subr.bf16.mxu0 0
        %1315 = vmatpush1.bf16.msra.mxu0 0
        %1316 = vmatprep.subr.bf16.mxu0 0
        %1317 = vmatpush1.bf16.msra.mxu0 0
        %1318 = vmatprep.subr.bf16.mxu0 0
        %1319 = vmatpush1.bf16.msra.mxu0 0
        %1320 = vmatprep.subr.bf16.mxu0 0
        %1321 = vmatpush1.bf16.msra.mxu0 0
        %1322 = vmatprep.subr.bf16.mxu0 0
        %1323 = vmatpush1.bf16.msra.mxu0 0
        %1324 = vmatprep.subr.bf16.mxu0 0
        %1325 = vmatpush1.bf16.msra.mxu0 0
        %1326 = vmatprep.subr.bf16.mxu0 0
        %1327 = vmatpush1.bf16.msra.mxu0 0
        %1328 = vmatprep.subr.bf16.mxu0 0
        %1329 = vmatpush1.bf16.msra.mxu0 0
        %1330 = vmatprep.subr.bf16.mxu0 0
        %1331 = vmatpush1.bf16.msra.mxu0 0
        %1332 = vmatprep.subr.bf16.mxu0 0
        %1333 = vmatpush1.bf16.msra.mxu0 0
        %1334 = vmatprep.subr.bf16.mxu0 0
        %1335 = vmatpush1.bf16.msra.mxu0 0
        %1336 = vmatprep.subr.bf16.mxu0 0
        %1337 = vmatpush1.bf16.msra.mxu0 0
        %1338 = vmatprep.subr.bf16.mxu0 0
        %1339 = vmatpush1.bf16.msra.mxu0 0
        %1340 = vmatprep.subr.bf16.mxu0 0
        %1341 = vmatpush1.bf16.msra.mxu0 0
        %1342 = vmatprep.mubr.bf16.mxu0 0
        %1343 = vmatmul.mubr.bf16.gmra.mrb[0].mxu0 %v1308
        %v1344 = vpop.f32.mrb[0].mxu0
        %v1345 = vadd.f32 %v1292, %v1344
        %v1346 = vpop.f32.mrb[0].mxu0
        %v1347 = vpop.f32.mrb[0].mxu0
        %v1348 = vpop.f32.mrb[0].mxu0
        %1349 = vdwg.mxu0
        %v1350 = vpack.c.bf16 %v1345, %v1345
        %1352 = vrot.lane.b32.xlu0 %v1350, 120
        %v1353 = vpop.permute.xlu0 %1352
        %1354 = vrot.lane.b32.xlu0 %v1350, 112
        %v1355 = vpop.permute.xlu0 %1354
        %1356 = vrot.lane.b32.xlu0 %v1350, 104
        %v1357 = vpop.permute.xlu0 %1356
        %v1359 = vunpack.c.l.s4 1983009808
        %v1360 = vunpack.c.0.s8 %v1359
        %v1361 = vlaneseq
        %v1362 = vshrl.u32 %v1361, 7
        %v1363 = vsub.s32 %v1360, %v1362
        %v1364 = vrot.slane %v1350, %v1363
        %v1367 = vunpack.c.l.s4 1983009808
        %v1368 = vunpack.c.0.s8 %v1367
        %v1369 = vlaneseq
        %v1370 = vshrl.u32 %v1369, 7
        %v1371 = vsub.s32 %v1368, %v1370
        %v1372 = vrot.slane %v1355, %v1371
        %v1373 = vcombine.low %v1364, %v1372
        %v1374 = vcombine.high %v1364, %v1372
        %v1376 = vunpack.c.l.s4 1934713408
        %v1377 = vunpack.c.0.s8 %v1376
        %v1378 = vlaneseq
        %v1379 = vshrl.u32 %v1378, 7
        %v1380 = vsub.s32 %v1377, %v1379
        %v1381 = vrot.slane %v1373, %v1380
        %v1383 = vunpack.c.l.s4 1934713408
        %v1384 = vunpack.c.0.s8 %v1383
        %v1385 = vlaneseq
        %v1386 = vshrl.u32 %v1385, 7
        %v1387 = vsub.s32 %v1384, %v1386
        %v1388 = vrot.slane %v1374, %v1387
        %v1389 = vcombine.high %v1381, 0
        %v1390 = vcombine.high %v1388, 0
        %v1393 = vunpack.c.l.s4 1983009808
        %v1394 = vunpack.c.0.s8 %v1393
        %v1395 = vlaneseq
        %v1396 = vshrl.u32 %v1395, 7
        %v1397 = vsub.s32 %v1394, %v1396
        %v1398 = vrot.slane %v1353, %v1397
        %v1401 = vunpack.c.l.s4 1983009808
        %v1402 = vunpack.c.0.s8 %v1401
        %v1403 = vlaneseq
        %v1404 = vshrl.u32 %v1403, 7
        %v1405 = vsub.s32 %v1402, %v1404
        %v1406 = vrot.slane %v1357, %v1405
        %v1407 = vcombine.low %v1398, %v1406
        %v1408 = vcombine.high %v1398, %v1406
        %v1410 = vunpack.c.l.s4 1934713408
        %v1411 = vunpack.c.0.s8 %v1410
        %v1412 = vlaneseq
        %v1413 = vshrl.u32 %v1412, 7
        %v1414 = vsub.s32 %v1411, %v1413
        %v1415 = vrot.slane %v1407, %v1414
        %v1417 = vunpack.c.l.s4 1934713408
        %v1418 = vunpack.c.0.s8 %v1417
        %v1419 = vlaneseq
        %v1420 = vshrl.u32 %v1419, 7
        %v1421 = vsub.s32 %v1418, %v1420
        %v1422 = vrot.slane %v1408, %v1421
        %v1423 = vcombine.high %v1415, 0
        %v1424 = vcombine.high %v1422, 0
        %v1427 = vpack.i.b16 %v1415, %v1381
        %v1429 = vshrl.u32 %v1381, 16
        %v1430 = vshrl.u32 %v1415, 16
        %v1431 = vpack.i.b16 %v1430, %v1429
        %v1435 = vpack.i.b16 %v1423, %v1389
        %v1437 = vshrl.u32 %v1389, 16
        %v1438 = vshrl.u32 %v1423, 16
        %v1439 = vpack.i.b16 %v1438, %v1437
        %v1443 = vpack.i.b16 %v1422, %v1388
        %v1445 = vshrl.u32 %v1388, 16
        %v1446 = vshrl.u32 %v1422, 16
        %v1447 = vpack.i.b16 %v1446, %v1445
        %v1451 = vpack.i.b16 %v1424, %v1390
        %v1453 = vshrl.u32 %v1390, 16
        %v1454 = vshrl.u32 %v1424, 16
        %v1455 = vpack.i.b16 %v1454, %v1453
        %v1457 = vcombine.low %v1427, %v1443
        %v1459 = vunpack.c.l.s4 1983009808
        %v1460 = vunpack.c.0.s8 %v1459
        %v1461 = vlaneseq
        %v1462 = vshrl.u32 %v1461, 7
        %v1463 = vsub.s32 %v1460, %v1462
        %v1464 = vrot.slane %v1457, %v1463
        %v1465 = vcombine.low %v1435, %v1451
        %v1467 = vunpack.c.l.s4 1983009808
        %v1468 = vunpack.c.0.s8 %v1467
        %v1469 = vlaneseq
        %v1470 = vshrl.u32 %v1469, 7
        %v1471 = vsub.s32 %v1468, %v1470
        %v1472 = vrot.slane %v1465, %v1471
        %v1473 = vcombine.low %v1464, %v1472
        %v1475 = vunpack.c.l.s4 1934713408
        %v1476 = vunpack.c.0.s8 %v1475
        %v1477 = vlaneseq
        %v1478 = vshrl.u32 %v1477, 7
        %v1479 = vsub.s32 %v1476, %v1478
        %v1480 = vrot.slane %v1473, %v1479
        %v1481 = vcombine.high %v1480, 0
        %v1482 = vcombine.low %v1431, %v1447
        %v1484 = vunpack.c.l.s4 1983009808
        %v1485 = vunpack.c.0.s8 %v1484
        %v1486 = vlaneseq
        %v1487 = vshrl.u32 %v1486, 7
        %v1488 = vsub.s32 %v1485, %v1487
        %v1489 = vrot.slane %v1482, %v1488
        %v1490 = vcombine.low %v1439, %v1455
        %v1492 = vunpack.c.l.s4 1983009808
        %v1493 = vunpack.c.0.s8 %v1492
        %v1494 = vlaneseq
        %v1495 = vshrl.u32 %v1494, 7
        %v1496 = vsub.s32 %v1493, %v1495
        %v1497 = vrot.slane %v1490, %v1496
        %v1498 = vcombine.low %v1489, %v1497
        %v1500 = vunpack.c.l.s4 1934713408
        %v1501 = vunpack.c.0.s8 %v1500
        %v1502 = vlaneseq
        %v1503 = vshrl.u32 %v1502, 7
        %v1504 = vsub.s32 %v1501, %v1503
        %v1505 = vrot.slane %v1498, %v1504
        %v1506 = vcombine.high %v1505, 0
        %v1509 = vpack.i.b16 %v1505, %v1480
        %v1510 = vshrl.u32 %v1480, 16
        %v1511 = vshrl.u32 %v1505, 16
        %v1512 = vpack.i.b16 %v1511, %v1510
        %v1515 = vpack.i.b16 %v1506, %v1481
        %v1516 = vshrl.u32 %v1481, 16
        %v1517 = vshrl.u32 %v1506, 16
        %v1518 = vpack.i.b16 %v1517, %v1516
        %vm1519 = vcmask 64512
        %v1521 = vsel %vm1519, %v1509, 0
        %v1524 = vsel %vm1519, %v1271, 0
        %1526 = vmatprep.subr.bf16.mxu0 0
        %1527 = vmatpush1.bf16.xpose.msra.mxu0 %v1524
        %1528 = vmatprep.subr.bf16.mxu0 0
        %1529 = vmatpush1.bf16.xpose.msra.mxu0 0
        %1530 = vmatprep.subr.bf16.mxu0 0
        %1531 = vmatpush1.bf16.xpose.msra.mxu0 0
        %1532 = vmatprep.subr.bf16.mxu0 0
        %1533 = vmatpush1.bf16.xpose.msra.mxu0 0
        %1534 = vmatprep.subr.bf16.mxu0 0
        %1535 = vmatpush1.bf16.xpose.msra.mxu0 0
        %1536 = vmatprep.subr.bf16.mxu0 0
        %1537 = vmatpush1.bf16.xpose.msra.mxu0 0
        %1538 = vmatprep.subr.bf16.mxu0 0
        %1539 = vmatpush1.bf16.xpose.msra.mxu0 0
        %1540 = vmatprep.subr.bf16.mxu0 0
        %1541 = vmatpush1.bf16.xpose.msra.mxu0 0
        %1542 = vmatprep.subr.bf16.mxu0 0
        %1543 = vmatpush1.bf16.xpose.msra.mxu0 0
        %1544 = vmatprep.subr.bf16.mxu0 0
        %1545 = vmatpush1.bf16.xpose.msra.mxu0 0
        %1546 = vmatprep.subr.bf16.mxu0 0
        %1547 = vmatpush1.bf16.xpose.msra.mxu0 0
        %1548 = vmatprep.subr.bf16.mxu0 0
        %1549 = vmatpush1.bf16.xpose.msra.mxu0 0
        %1550 = vmatprep.subr.bf16.mxu0 0
        %1551 = vmatpush1.bf16.xpose.msra.mxu0 0
        %1552 = vmatprep.subr.bf16.mxu0 0
        %1553 = vmatpush1.bf16.xpose.msra.mxu0 0
        %1554 = vmatprep.subr.bf16.mxu0 0
        %1555 = vmatpush1.bf16.xpose.msra.mxu0 0
        %1556 = vmatprep.subr.bf16.mxu0 0
        %1557 = vmatpush1.bf16.xpose.msra.mxu0 0
        %1558 = vmatprep.mubr.bf16.mxu0 0
        %1559 = vmatmul.mubr.bf16.gmra.mrb[0].mxu0 %v1521
        %v1560 = vpop.f32.mrb[0].mxu0
        %v1561 = vadd.f32 0.0, %v1560
        %v1562 = vpop.f32.mrb[0].mxu0
        %v1563 = vpop.f32.mrb[0].mxu0
        %v1564 = vpop.f32.mrb[0].mxu0
        %1565 = vdwg.mxu0
        %v1567 = vsel %vm1519, %v1512, 0
        %v1570 = vsel %vm1519, %v1272, 0
        %1572 = vmatprep.subr.bf16.mxu0 0
        %1573 = vmatpush1.bf16.xpose.msra.mxu0 %v1570
        %1574 = vmatprep.subr.bf16.mxu0 0
        %1575 = vmatpush1.bf16.xpose.msra.mxu0 0
        %1576 = vmatprep.subr.bf16.mxu0 0
        %1577 = vmatpush1.bf16.xpose.msra.mxu0 0
        %1578 = vmatprep.subr.bf16.mxu0 0
        %1579 = vmatpush1.bf16.xpose.msra.mxu0 0
        %1580 = vmatprep.subr.bf16.mxu0 0
        %1581 = vmatpush1.bf16.xpose.msra.mxu0 0
        %1582 = vmatprep.subr.bf16.mxu0 0
        %1583 = vmatpush1.bf16.xpose.msra.mxu0 0
        %1584 = vmatprep.subr.bf16.mxu0 0
        %1585 = vmatpush1.bf16.xpose.msra.mxu0 0
        %1586 = vmatprep.subr.bf16.mxu0 0
        %1587 = vmatpush1.bf16.xpose.msra.mxu0 0
        %1588 = vmatprep.subr.bf16.mxu0 0
        %1589 = vmatpush1.bf16.xpose.msra.mxu0 0
        %1590 = vmatprep.subr.bf16.mxu0 0
        %1591 = vmatpush1.bf16.xpose.msra.mxu0 0
        %1592 = vmatprep.subr.bf16.mxu0 0
        %1593 = vmatpush1.bf16.xpose.msra.mxu0 0
        %1594 = vmatprep.subr.bf16.mxu0 0
        %1595 = vmatpush1.bf16.xpose.msra.mxu0 0
        %1596 = vmatprep.subr.bf16.mxu0 0
        %1597 = vmatpush1.bf16.xpose.msra.mxu0 0
        %1598 = vmatprep.subr.bf16.mxu0 0
        %1599 = vmatpush1.bf16.xpose.msra.mxu0 0
        %1600 = vmatprep.subr.bf16.mxu0 0
        %1601 = vmatpush1.bf16.xpose.msra.mxu0 0
        %1602 = vmatprep.subr.bf16.mxu0 0
        %1603 = vmatpush1.bf16.xpose.msra.mxu0 0
        %1604 = vmatprep.mubr.bf16.mxu0 0
        %1605 = vmatmul.mubr.bf16.gmra.mrb[0].mxu0 %v1567
        %v1606 = vpop.f32.mrb[0].mxu0
        %v1607 = vadd.f32 0.0, %v1606
        %v1608 = vpop.f32.mrb[0].mxu0
        %v1609 = vpop.f32.mrb[0].mxu0
        %v1610 = vpop.f32.mrb[0].mxu0
        %1611 = vdwg.mxu0
        %v1613 = vsel %vm1519, %v1515, 0
        %v1616 = vsel %vm1519, %v1273, 0
        %1618 = vmatprep.subr.bf16.mxu0 0
        %1619 = vmatpush1.bf16.xpose.msra.mxu0 %v1616
        %1620 = vmatprep.subr.bf16.mxu0 0
        %1621 = vmatpush1.bf16.xpose.msra.mxu0 0
        %1622 = vmatprep.subr.bf16.mxu0 0
        %1623 = vmatpush1.bf16.xpose.msra.mxu0 0
        %1624 = vmatprep.subr.bf16.mxu0 0
        %1625 = vmatpush1.bf16.xpose.msra.mxu0 0
        %1626 = vmatprep.subr.bf16.mxu0 0
        %1627 = vmatpush1.bf16.xpose.msra.mxu0 0
        %1628 = vmatprep.subr.bf16.mxu0 0
        %1629 = vmatpush1.bf16.xpose.msra.mxu0 0
        %1630 = vmatprep.subr.bf16.mxu0 0
        %1631 = vmatpush1.bf16.xpose.msra.mxu0 0
        %1632 = vmatprep.subr.bf16.mxu0 0
        %1633 = vmatpush1.bf16.xpose.msra.mxu0 0
        %1634 = vmatprep.subr.bf16.mxu0 0
        %1635 = vmatpush1.bf16.xpose.msra.mxu0 0
        %1636 = vmatprep.subr.bf16.mxu0 0
        %1637 = vmatpush1.bf16.xpose.msra.mxu0 0
        %1638 = vmatprep.subr.bf16.mxu0 0
        %1639 = vmatpush1.bf16.xpose.msra.mxu0 0
        %1640 = vmatprep.subr.bf16.mxu0 0
        %1641 = vmatpush1.bf16.xpose.msra.mxu0 0
        %1642 = vmatprep.subr.bf16.mxu0 0
        %1643 = vmatpush1.bf16.xpose.msra.mxu0 0
        %1644 = vmatprep.subr.bf16.mxu0 0
        %1645 = vmatpush1.bf16.xpose.msra.mxu0 0
        %1646 = vmatprep.subr.bf16.mxu0 0
        %1647 = vmatpush1.bf16.xpose.msra.mxu0 0
        %1648 = vmatprep.subr.bf16.mxu0 0
        %1649 = vmatpush1.bf16.xpose.msra.mxu0 0
        %1650 = vmatprep.mubr.bf16.mxu0 0
        %1651 = vmatmul.mubr.bf16.gmra.mrb[0].mxu0 %v1613
        %v1652 = vpop.f32.mrb[0].mxu0
        %v1653 = vadd.f32 0.0, %v1652
        %v1654 = vpop.f32.mrb[0].mxu0
        %v1655 = vpop.f32.mrb[0].mxu0
        %v1656 = vpop.f32.mrb[0].mxu0
        %1657 = vdwg.mxu0
        %v1659 = vsel %vm1519, %v1518, 0
        %v1662 = vsel %vm1519, %v1274, 0
        %1664 = vmatprep.subr.bf16.mxu0 0
        %1665 = vmatpush1.bf16.xpose.msra.mxu0 %v1662
        %1666 = vmatprep.subr.bf16.mxu0 0
        %1667 = vmatpush1.bf16.xpose.msra.mxu0 0
        %1668 = vmatprep.subr.bf16.mxu0 0
        %1669 = vmatpush1.bf16.xpose.msra.mxu0 0
        %1670 = vmatprep.subr.bf16.mxu0 0
        %1671 = vmatpush1.bf16.xpose.msra.mxu0 0
        %1672 = vmatprep.subr.bf16.mxu0 0
        %1673 = vmatpush1.bf16.xpose.msra.mxu0 0
        %1674 = vmatprep.subr.bf16.mxu0 0
        %1675 = vmatpush1.bf16.xpose.msra.mxu0 0
        %1676 = vmatprep.subr.bf16.mxu0 0
        %1677 = vmatpush1.bf16.xpose.msra.mxu0 0
        %1678 = vmatprep.subr.bf16.mxu0 0
        %1679 = vmatpush1.bf16.xpose.msra.mxu0 0
        %1680 = vmatprep.subr.bf16.mxu0 0
        %1681 = vmatpush1.bf16.xpose.msra.mxu0 0
        %1682 = vmatprep.subr.bf16.mxu0 0
        %1683 = vmatpush1.bf16.xpose.msra.mxu0 0
        %1684 = vmatprep.subr.bf16.mxu0 0
        %1685 = vmatpush1.bf16.xpose.msra.mxu0 0
        %1686 = vmatprep.subr.bf16.mxu0 0
        %1687 = vmatpush1.bf16.xpose.msra.mxu0 0
        %1688 = vmatprep.subr.bf16.mxu0 0
        %1689 = vmatpush1.bf16.xpose.msra.mxu0 0
        %1690 = vmatprep.subr.bf16.mxu0 0
        %1691 = vmatpush1.bf16.xpose.msra.mxu0 0
        %1692 = vmatprep.subr.bf16.mxu0 0
        %1693 = vmatpush1.bf16.xpose.msra.mxu0 0
        %1694 = vmatprep.subr.bf16.mxu0 0
        %1695 = vmatpush1.bf16.xpose.msra.mxu0 0
        %1696 = vmatprep.mubr.bf16.mxu0 0
        %1697 = vmatmul.mubr.bf16.gmra.mrb[0].mxu0 %v1659
        %v1698 = vpop.f32.mrb[0].mxu0
        %v1699 = vadd.f32 0.0, %v1698
        %v1700 = vpop.f32.mrb[0].mxu0
        %v1701 = vpop.f32.mrb[0].mxu0
        %v1702 = vpop.f32.mrb[0].mxu0
        %1703 = vdwg.mxu0
        %vm1704 = vcmask 130048
        %v1705 = vsel %vm1704, %v1561, -inf
        %1706 = vmax.xlane.f32.xlu0 %v1705
        %v1707 = vpop.xlane.xlu0 %1706
        %v1708 = vsel %vm1704, %v1607, -inf
        %1709 = vmax.xlane.f32.xlu0 %v1708
        %v1710 = vpop.xlane.xlu0 %1709
        %v1711 = vsel %vm1704, %v1653, -inf
        %1712 = vmax.xlane.f32.xlu0 %v1711
        %v1713 = vpop.xlane.xlu0 %1712
        %v1714 = vsel %vm1704, %v1699, -inf
        %1715 = vmax.xlane.f32.xlu0 %v1714
        %v1716 = vpop.xlane.xlu0 %1715
        %v1717 = vsub.f32 %v1561, %v1707
        %v1718 = vsub.f32 %v1607, %v1710
        %v1719 = vsub.f32 %v1653, %v1713
        %v1720 = vsub.f32 %v1699, %v1716
        %v1721 = vmul.f32 %v1717, 1.442695
        %v1722 = vpow.pop %v1721
        %v1723 = vmul.f32 %v1718, 1.442695
        %v1724 = vpow.pop %v1723
        %v1725 = vmul.f32 %v1719, 1.442695
        %v1726 = vpow.pop %v1725
        %v1727 = vmul.f32 %v1720, 1.442695
        %v1728 = vpow.pop %v1727
        %v1729 = vsel %vm1704, %v1722, 0.0
        %1730 = vadd.xlane.f32.xlu0 %v1729
        %v1731 = vpop.xlane.xlu0 %1730
        %v1732 = vsel %vm1704, %v1724, 0.0
        %1733 = vadd.xlane.f32.xlu0 %v1732
        %v1734 = vpop.xlane.xlu0 %1733
        %v1735 = vsel %vm1704, %v1726, 0.0
        %1736 = vadd.xlane.f32.xlu0 %v1735
        %v1737 = vpop.xlane.xlu0 %1736
        %v1738 = vsel %vm1704, %v1728, 0.0
        %1739 = vadd.xlane.f32.xlu0 %v1738
        %v1740 = vpop.xlane.xlu0 %1739
        %v1741 = vpack.c.bf16 %v1722, %v1722
        %v1742 = vpack.c.bf16 %v1724, %v1724
        %v1743 = vpack.c.bf16 %v1726, %v1726
        %v1744 = vpack.c.bf16 %v1728, %v1728
        %v1746 = vsel %vm1704, %v1741, 0
        %1748 = vmatprep.subr.bf16.mxu0 0
        %1749 = vmatpush1.bf16.msra.mxu0 %v1275
        %1750 = vmatprep.subr.bf16.mxu0 0
        %1751 = vmatpush1.bf16.msra.mxu0 0
        %1752 = vmatprep.subr.bf16.mxu0 0
        %1753 = vmatpush1.bf16.msra.mxu0 0
        %1754 = vmatprep.subr.bf16.mxu0 0
        %1755 = vmatpush1.bf16.msra.mxu0 0
        %1756 = vmatprep.subr.bf16.mxu0 0
        %1757 = vmatpush1.bf16.msra.mxu0 0
        %1758 = vmatprep.subr.bf16.mxu0 0
        %1759 = vmatpush1.bf16.msra.mxu0 0
        %1760 = vmatprep.subr.bf16.mxu0 0
        %1761 = vmatpush1.bf16.msra.mxu0 0
        %1762 = vmatprep.subr.bf16.mxu0 0
        %1763 = vmatpush1.bf16.msra.mxu0 0
        %1764 = vmatprep.subr.bf16.mxu0 0
        %1765 = vmatpush1.bf16.msra.mxu0 0
        %1766 = vmatprep.subr.bf16.mxu0 0
        %1767 = vmatpush1.bf16.msra.mxu0 0
        %1768 = vmatprep.subr.bf16.mxu0 0
        %1769 = vmatpush1.bf16.msra.mxu0 0
        %1770 = vmatprep.subr.bf16.mxu0 0
        %1771 = vmatpush1.bf16.msra.mxu0 0
        %1772 = vmatprep.subr.bf16.mxu0 0
        %1773 = vmatpush1.bf16.msra.mxu0 0
        %1774 = vmatprep.subr.bf16.mxu0 0
        %1775 = vmatpush1.bf16.msra.mxu0 0
        %1776 = vmatprep.subr.bf16.mxu0 0
        %1777 = vmatpush1.bf16.msra.mxu0 0
        %1778 = vmatprep.subr.bf16.mxu0 0
        %1779 = vmatpush1.bf16.msra.mxu0 0
        %1780 = vmatprep.mubr.bf16.mxu0 0
        %1781 = vmatmul.mubr.bf16.gmra.mrb[0].mxu0 %v1746
        %v1782 = vpop.f32.mrb[0].mxu0
        %v1783 = vadd.f32 0.0, %v1782
        %v1784 = vpop.f32.mrb[0].mxu0
        %v1785 = vpop.f32.mrb[0].mxu0
        %v1786 = vpop.f32.mrb[0].mxu0
        %1787 = vdwg.mxu0
        %v1789 = vsel %vm1704, %v1742, 0
        %1791 = vmatprep.subr.bf16.mxu0 0
        %1792 = vmatpush1.bf16.msra.mxu0 %v1276
        %1793 = vmatprep.subr.bf16.mxu0 0
        %1794 = vmatpush1.bf16.msra.mxu0 0
        %1795 = vmatprep.subr.bf16.mxu0 0
        %1796 = vmatpush1.bf16.msra.mxu0 0
        %1797 = vmatprep.subr.bf16.mxu0 0
        %1798 = vmatpush1.bf16.msra.mxu0 0
        %1799 = vmatprep.subr.bf16.mxu0 0
        %1800 = vmatpush1.bf16.msra.mxu0 0
        %1801 = vmatprep.subr.bf16.mxu0 0
        %1802 = vmatpush1.bf16.msra.mxu0 0
        %1803 = vmatprep.subr.bf16.mxu0 0
        %1804 = vmatpush1.bf16.msra.mxu0 0
        %1805 = vmatprep.subr.bf16.mxu0 0
        %1806 = vmatpush1.bf16.msra.mxu0 0
        %1807 = vmatprep.subr.bf16.mxu0 0
        %1808 = vmatpush1.bf16.msra.mxu0 0
        %1809 = vmatprep.subr.bf16.mxu0 0
        %1810 = vmatpush1.bf16.msra.mxu0 0
        %1811 = vmatprep.subr.bf16.mxu0 0
        %1812 = vmatpush1.bf16.msra.mxu0 0
        %1813 = vmatprep.subr.bf16.mxu0 0
        %1814 = vmatpush1.bf16.msra.mxu0 0
        %1815 = vmatprep.subr.bf16.mxu0 0
        %1816 = vmatpush1.bf16.msra.mxu0 0
        %1817 = vmatprep.subr.bf16.mxu0 0
        %1818 = vmatpush1.bf16.msra.mxu0 0
        %1819 = vmatprep.subr.bf16.mxu0 0
        %1820 = vmatpush1.bf16.msra.mxu0 0
        %1821 = vmatprep.subr.bf16.mxu0 0
        %1822 = vmatpush1.bf16.msra.mxu0 0
        %1823 = vmatprep.mubr.bf16.mxu0 0
        %1824 = vmatmul.mubr.bf16.gmra.mrb[0].mxu0 %v1789
        %v1825 = vpop.f32.mrb[0].mxu0
        %v1826 = vadd.f32 0.0, %v1825
        %v1827 = vpop.f32.mrb[0].mxu0
        %v1828 = vpop.f32.mrb[0].mxu0
        %v1829 = vpop.f32.mrb[0].mxu0
        %1830 = vdwg.mxu0
        %v1832 = vsel %vm1704, %v1743, 0
        %1834 = vmatprep.subr.bf16.mxu0 0
        %1835 = vmatpush1.bf16.msra.mxu0 %v1277
        %1836 = vmatprep.subr.bf16.mxu0 0
        %1837 = vmatpush1.bf16.msra.mxu0 0
        %1838 = vmatprep.subr.bf16.mxu0 0
        %1839 = vmatpush1.bf16.msra.mxu0 0
        %1840 = vmatprep.subr.bf16.mxu0 0
        %1841 = vmatpush1.bf16.msra.mxu0 0
        %1842 = vmatprep.subr.bf16.mxu0 0
        %1843 = vmatpush1.bf16.msra.mxu0 0
        %1844 = vmatprep.subr.bf16.mxu0 0
        %1845 = vmatpush1.bf16.msra.mxu0 0
        %1846 = vmatprep.subr.bf16.mxu0 0
        %1847 = vmatpush1.bf16.msra.mxu0 0
        %1848 = vmatprep.subr.bf16.mxu0 0
        %1849 = vmatpush1.bf16.msra.mxu0 0
        %1850 = vmatprep.subr.bf16.mxu0 0
        %1851 = vmatpush1.bf16.msra.mxu0 0
        %1852 = vmatprep.subr.bf16.mxu0 0
        %1853 = vmatpush1.bf16.msra.mxu0 0
        %1854 = vmatprep.subr.bf16.mxu0 0
        %1855 = vmatpush1.bf16.msra.mxu0 0
        %1856 = vmatprep.subr.bf16.mxu0 0
        %1857 = vmatpush1.bf16.msra.mxu0 0
        %1858 = vmatprep.subr.bf16.mxu0 0
        %1859 = vmatpush1.bf16.msra.mxu0 0
        %1860 = vmatprep.subr.bf16.mxu0 0
        %1861 = vmatpush1.bf16.msra.mxu0 0
        %1862 = vmatprep.subr.bf16.mxu0 0
        %1863 = vmatpush1.bf16.msra.mxu0 0
        %1864 = vmatprep.subr.bf16.mxu0 0
        %1865 = vmatpush1.bf16.msra.mxu0 0
        %1866 = vmatprep.mubr.bf16.mxu0 0
        %1867 = vmatmul.mubr.bf16.gmra.mrb[0].mxu0 %v1832
        %v1868 = vpop.f32.mrb[0].mxu0
        %v1869 = vadd.f32 0.0, %v1868
        %v1870 = vpop.f32.mrb[0].mxu0
        %v1871 = vpop.f32.mrb[0].mxu0
        %v1872 = vpop.f32.mrb[0].mxu0
        %1873 = vdwg.mxu0
        %v1875 = vsel %vm1704, %v1744, 0
        %1877 = vmatprep.subr.bf16.mxu0 0
        %1878 = vmatpush1.bf16.msra.mxu0 %v1278
        %1879 = vmatprep.subr.bf16.mxu0 0
        %1880 = vmatpush1.bf16.msra.mxu0 0
        %1881 = vmatprep.subr.bf16.mxu0 0
        %1882 = vmatpush1.bf16.msra.mxu0 0
        %1883 = vmatprep.subr.bf16.mxu0 0
        %1884 = vmatpush1.bf16.msra.mxu0 0
        %1885 = vmatprep.subr.bf16.mxu0 0
        %1886 = vmatpush1.bf16.msra.mxu0 0
        %1887 = vmatprep.subr.bf16.mxu0 0
        %1888 = vmatpush1.bf16.msra.mxu0 0
        %1889 = vmatprep.subr.bf16.mxu0 0
        %1890 = vmatpush1.bf16.msra.mxu0 0
        %1891 = vmatprep.subr.bf16.mxu0 0
        %1892 = vmatpush1.bf16.msra.mxu0 0
        %1893 = vmatprep.subr.bf16.mxu0 0
        %1894 = vmatpush1.bf16.msra.mxu0 0
        %1895 = vmatprep.subr.bf16.mxu0 0
        %1896 = vmatpush1.bf16.msra.mxu0 0
        %1897 = vmatprep.subr.bf16.mxu0 0
        %1898 = vmatpush1.bf16.msra.mxu0 0
        %1899 = vmatprep.subr.bf16.mxu0 0
        %1900 = vmatpush1.bf16.msra.mxu0 0
        %1901 = vmatprep.subr.bf16.mxu0 0
        %1902 = vmatpush1.bf16.msra.mxu0 0
        %1903 = vmatprep.subr.bf16.mxu0 0
        %1904 = vmatpush1.bf16.msra.mxu0 0
        %1905 = vmatprep.subr.bf16.mxu0 0
        %1906 = vmatpush1.bf16.msra.mxu0 0
        %1907 = vmatprep.subr.bf16.mxu0 0
        %1908 = vmatpush1.bf16.msra.mxu0 0
        %1909 = vmatprep.mubr.bf16.mxu0 0
        %1910 = vmatmul.mubr.bf16.gmra.mrb[0].mxu0 %v1875
        %v1911 = vpop.f32.mrb[0].mxu0
        %v1912 = vadd.f32 0.0, %v1911
        %v1913 = vpop.f32.mrb[0].mxu0
        %v1914 = vpop.f32.mrb[0].mxu0
        %v1915 = vpop.f32.mrb[0].mxu0
        %1916 = vdwg.mxu0
        %v1917 = vrcp.pop %v1731
        %v1918 = vrcp.pop %v1734
        %v1919 = vrcp.pop %v1737
        %v1920 = vrcp.pop %v1740
        %v1921 = vmul.f32 %v1783, %v1917
        %v1922 = vmul.f32 %v1826, %v1918
        %v1923 = vmul.f32 %v1869, %v1919
        %v1924 = vmul.f32 %v1912, %v1920
        %v1925 = vpack.c.bf16 %v1921, %v1921
        %v1926 = vpack.c.bf16 %v1922, %v1922
        %v1927 = vpack.c.bf16 %v1923, %v1923
        %v1928 = vpack.c.bf16 %v1924, %v1924
        %v1929 = vld [vmem:[%s7] sm:$0xf]
        %s1930 = scalar_lea.vmem %s7, 4
        %v1931 = vld [vmem:[%s1930] sm:$0xf]
        %v1933 = vsel %vm1519, %v1926, 0
        %vm1935 = vcmask 1043456
        %v1937 = vsel %vm1935, %v1931, 0
        %1939 = vmatprep.subr.bf16.mxu0 0
        %1940 = vmatpush1.bf16.msra.mxu0 %v1937
        %1941 = vmatprep.subr.bf16.mxu0 0
        %1942 = vmatpush1.bf16.msra.mxu0 0
        %1943 = vmatprep.subr.bf16.mxu0 0
        %1944 = vmatpush1.bf16.msra.mxu0 0
        %1945 = vmatprep.subr.bf16.mxu0 0
        %1946 = vmatpush1.bf16.msra.mxu0 0
        %1947 = vmatprep.subr.bf16.mxu0 0
        %1948 = vmatpush1.bf16.msra.mxu0 0
        %1949 = vmatprep.subr.bf16.mxu0 0
        %1950 = vmatpush1.bf16.msra.mxu0 0
        %1951 = vmatprep.subr.bf16.mxu0 0
        %1952 = vmatpush1.bf16.msra.mxu0 0
        %1953 = vmatprep.subr.bf16.mxu0 0
        %1954 = vmatpush1.bf16.msra.mxu0 0
        %1955 = vmatprep.subr.bf16.mxu0 0
        %1956 = vmatpush1.bf16.msra.mxu0 0
        %1957 = vmatprep.subr.bf16.mxu0 0
        %1958 = vmatpush1.bf16.msra.mxu0 0
        %1959 = vmatprep.subr.bf16.mxu0 0
        %1960 = vmatpush1.bf16.msra.mxu0 0
        %1961 = vmatprep.subr.bf16.mxu0 0
        %1962 = vmatpush1.bf16.msra.mxu0 0
        %1963 = vmatprep.subr.bf16.mxu0 0
        %1964 = vmatpush1.bf16.msra.mxu0 0
        %1965 = vmatprep.subr.bf16.mxu0 0
        %1966 = vmatpush1.bf16.msra.mxu0 0
        %1967 = vmatprep.subr.bf16.mxu0 0
        %1968 = vmatpush1.bf16.msra.mxu0 0
        %1969 = vmatprep.subr.bf16.mxu0 0
        %1970 = vmatpush1.bf16.msra.mxu0 0
        %1971 = vmatprep.mubr.bf16.mxu0 0
        %1972 = vmatmul.mubr.bf16.gmra.mrb[0].mxu0 %v1933
        %v1973 = vpop.f32.mrb[0].mxu0
        %v1974 = vadd.f32 0.0, %v1973
        %v1975 = vpop.f32.mrb[0].mxu0
        %v1976 = vpop.f32.mrb[0].mxu0
        %v1977 = vpop.f32.mrb[0].mxu0
        %1978 = vdwg.mxu0
        %v1980 = vsel %vm1519, %v1925, 0
        %v1983 = vsel %vm1935, %v1929, 0
        %1985 = vmatprep.subr.bf16.mxu0 0
        %1986 = vmatpush1.bf16.msra.mxu0 %v1983
        %1987 = vmatprep.subr.bf16.mxu0 0
        %1988 = vmatpush1.bf16.msra.mxu0 0
        %1989 = vmatprep.subr.bf16.mxu0 0
        %1990 = vmatpush1.bf16.msra.mxu0 0
        %1991 = vmatprep.subr.bf16.mxu0 0
        %1992 = vmatpush1.bf16.msra.mxu0 0
        %1993 = vmatprep.subr.bf16.mxu0 0
        %1994 = vmatpush1.bf16.msra.mxu0 0
        %1995 = vmatprep.subr.bf16.mxu0 0
        %1996 = vmatpush1.bf16.msra.mxu0 0
        %1997 = vmatprep.subr.bf16.mxu0 0
        %1998 = vmatpush1.bf16.msra.mxu0 0
        %1999 = vmatprep.subr.bf16.mxu0 0
        %2000 = vmatpush1.bf16.msra.mxu0 0
        %2001 = vmatprep.subr.bf16.mxu0 0
        %2002 = vmatpush1.bf16.msra.mxu0 0
        %2003 = vmatprep.subr.bf16.mxu0 0
        %2004 = vmatpush1.bf16.msra.mxu0 0
        %2005 = vmatprep.subr.bf16.mxu0 0
        %2006 = vmatpush1.bf16.msra.mxu0 0
        %2007 = vmatprep.subr.bf16.mxu0 0
        %2008 = vmatpush1.bf16.msra.mxu0 0
        %2009 = vmatprep.subr.bf16.mxu0 0
        %2010 = vmatpush1.bf16.msra.mxu0 0
        %2011 = vmatprep.subr.bf16.mxu0 0
        %2012 = vmatpush1.bf16.msra.mxu0 0
        %2013 = vmatprep.subr.bf16.mxu0 0
        %2014 = vmatpush1.bf16.msra.mxu0 0
        %2015 = vmatprep.subr.bf16.mxu0 0
        %2016 = vmatpush1.bf16.msra.mxu0 0
        %2017 = vmatprep.mubr.bf16.mxu0 0
        %2018 = vmatmul.mubr.bf16.gmra.mrb[0].mxu0 %v1980
        %v2019 = vpop.f32.mrb[0].mxu0
        %v2020 = vadd.f32 %v1974, %v2019
        %v2021 = vpop.f32.mrb[0].mxu0
        %v2022 = vpop.f32.mrb[0].mxu0
        %v2023 = vpop.f32.mrb[0].mxu0
        %2024 = vdwg.mxu0
        %s2025 = scalar_lea.vmem %s7, 8
        %v2026 = vld [vmem:[%s2025] sm:$0xf]
        %v2028 = vsel %vm1519, %v1927, 0
        %v2031 = vsel %vm1935, %v2026, 0
        %2033 = vmatprep.subr.bf16.mxu0 0
        %2034 = vmatpush1.bf16.msra.mxu0 %v2031
        %2035 = vmatprep.subr.bf16.mxu0 0
        %2036 = vmatpush1.bf16.msra.mxu0 0
        %2037 = vmatprep.subr.bf16.mxu0 0
        %2038 = vmatpush1.bf16.msra.mxu0 0
        %2039 = vmatprep.subr.bf16.mxu0 0
        %2040 = vmatpush1.bf16.msra.mxu0 0
        %2041 = vmatprep.subr.bf16.mxu0 0
        %2042 = vmatpush1.bf16.msra.mxu0 0
        %2043 = vmatprep.subr.bf16.mxu0 0
        %2044 = vmatpush1.bf16.msra.mxu0 0
        %2045 = vmatprep.subr.bf16.mxu0 0
        %2046 = vmatpush1.bf16.msra.mxu0 0
        %2047 = vmatprep.subr.bf16.mxu0 0
        %2048 = vmatpush1.bf16.msra.mxu0 0
        %2049 = vmatprep.subr.bf16.mxu0 0
        %2050 = vmatpush1.bf16.msra.mxu0 0
        %2051 = vmatprep.subr.bf16.mxu0 0
        %2052 = vmatpush1.bf16.msra.mxu0 0
        %2053 = vmatprep.subr.bf16.mxu0 0
        %2054 = vmatpush1.bf16.msra.mxu0 0
        %2055 = vmatprep.subr.bf16.mxu0 0
        %2056 = vmatpush1.bf16.msra.mxu0 0
        %2057 = vmatprep.subr.bf16.mxu0 0
        %2058 = vmatpush1.bf16.msra.mxu0 0
        %2059 = vmatprep.subr.bf16.mxu0 0
        %2060 = vmatpush1.bf16.msra.mxu0 0
        %2061 = vmatprep.subr.bf16.mxu0 0
        %2062 = vmatpush1.bf16.msra.mxu0 0
        %2063 = vmatprep.subr.bf16.mxu0 0
        %2064 = vmatpush1.bf16.msra.mxu0 0
        %2065 = vmatprep.mubr.bf16.mxu0 0
        %2066 = vmatmul.mubr.bf16.gmra.mrb[0].mxu0 %v2028
        %v2067 = vpop.f32.mrb[0].mxu0
        %v2068 = vadd.f32 0.0, %v2067
        %v2069 = vpop.f32.mrb[0].mxu0
        %v2070 = vpop.f32.mrb[0].mxu0
        %v2071 = vpop.f32.mrb[0].mxu0
        %2072 = vdwg.mxu0
        %v2073 = vadd.f32 %v2020, %v2068
        %s2074 = scalar_lea.vmem %s7, 12
        %v2075 = vld [vmem:[%s2074] sm:$0xf]
        %v2077 = vsel %vm1519, %v1928, 0
        %v2080 = vsel %vm1935, %v2075, 0
        %2082 = vmatprep.subr.bf16.mxu0 0
        %2083 = vmatpush1.bf16.msra.mxu0 %v2080
        %2084 = vmatprep.subr.bf16.mxu0 0
        %2085 = vmatpush1.bf16.msra.mxu0 0
        %2086 = vmatprep.subr.bf16.mxu0 0
        %2087 = vmatpush1.bf16.msra.mxu0 0
        %2088 = vmatprep.subr.bf16.mxu0 0
        %2089 = vmatpush1.bf16.msra.mxu0 0
        %2090 = vmatprep.subr.bf16.mxu0 0
        %2091 = vmatpush1.bf16.msra.mxu0 0
        %2092 = vmatprep.subr.bf16.mxu0 0
        %2093 = vmatpush1.bf16.msra.mxu0 0
        %2094 = vmatprep.subr.bf16.mxu0 0
        %2095 = vmatpush1.bf16.msra.mxu0 0
        %2096 = vmatprep.subr.bf16.mxu0 0
        %2097 = vmatpush1.bf16.msra.mxu0 0
        %2098 = vmatprep.subr.bf16.mxu0 0
        %2099 = vmatpush1.bf16.msra.mxu0 0
        %2100 = vmatprep.subr.bf16.mxu0 0
        %2101 = vmatpush1.bf16.msra.mxu0 0
        %2102 = vmatprep.subr.bf16.mxu0 0
        %2103 = vmatpush1.bf16.msra.mxu0 0
        %2104 = vmatprep.subr.bf16.mxu0 0
        %2105 = vmatpush1.bf16.msra.mxu0 0
        %2106 = vmatprep.subr.bf16.mxu0 0
        %2107 = vmatpush1.bf16.msra.mxu0 0
        %2108 = vmatprep.subr.bf16.mxu0 0
        %2109 = vmatpush1.bf16.msra.mxu0 0
        %2110 = vmatprep.subr.bf16.mxu0 0
        %2111 = vmatpush1.bf16.msra.mxu0 0
        %2112 = vmatprep.subr.bf16.mxu0 0
        %2113 = vmatpush1.bf16.msra.mxu0 0
        %2114 = vmatprep.mubr.bf16.mxu0 0
        %2115 = vmatmul.mubr.bf16.gmra.mrb[0].mxu0 %v2077
        %v2116 = vpop.f32.mrb[0].mxu0
        %v2117 = vadd.f32 0.0, %v2116
        %v2118 = vpop.f32.mrb[0].mxu0
        %v2119 = vpop.f32.mrb[0].mxu0
        %v2120 = vpop.f32.mrb[0].mxu0
        %2121 = vdwg.mxu0
        %v2122 = vadd.f32 %v2073, %v2117
        %v2123 = vld [vmem:[%s11] sm:$0x1]
        %v2125 = vlaneseq
        %v2126 = vshrl.u32 %v2125, 7
        %v2127 = vsub.s32 0, %v2126
        %v2128 = vrot.slane %v2123, %v2127
        %v2130 = vadd.f32 %v2122, %v2128
        %v2131 = vadd.f32 %v1279, %v2130
        %v2132 = vsel %vm1306, %v2131, 0.0
        %2133 = vadd.xlane.f32.xlu0 %v2132
        %v2134 = vpop.xlane.xlu0 %2133
        %v2135 = vrcp.pop 32.0
        %v2136 = vmul.f32 %v2134, %v2135
        %v2137 = vsub.f32 %v2131, %v2136
        %v2138 = vmul.f32 %v2137, %v2137
        %v2139 = vsel %vm1306, %v2138, 0.0
        %2140 = vadd.xlane.f32.xlu0 %v2139
        %v2141 = vpop.xlane.xlu0 %2140
        %v2142 = vmul.f32 %v2141, %v2135
        %v2143 = vadd.f32 %v2142, 1e-05
        %v2144 = vrsqrt.pop %v2143
        %v2145 = vld [vmem:[%s12] sm:$0x1]
        %v2147 = vlaneseq
        %v2148 = vshrl.u32 %v2147, 7
        %v2149 = vsub.s32 0, %v2148
        %v2150 = vrot.slane %v2145, %v2149
        %v2152 = vmul.f32 %v2144, %v2150
        %v2153 = vmul.f32 %v2137, %v2152
        %v2154 = vld [vmem:[%s13] sm:$0x1]
        %v2156 = vlaneseq
        %v2157 = vshrl.u32 %v2156, 7
        %v2158 = vsub.s32 0, %v2157
        %v2159 = vrot.slane %v2154, %v2158
        %v2161 = vadd.f32 %v2153, %v2159
        %2162 = vst.msk [vmem:[%s531] sm:$0xff] %vm1306, %v2161
        %s2163 = sand.u32 %s368, 1
        %s2164 = scalar_lea.sflag [#allocation5], %s2163
        %s2165 = sand.u32 %s368, 1
        %s2166 = smul.addr %s2165, 8
        %s2167 = scalar_lea.vmem [#allocation4], %s2166
        // Predicated region
        $region81: #{cross_attention_layer_bld.1} parent=75 // pred_check
          %p2168 = pneg %p378
        $region82: #{cross_attention_layer_bld.1} parent=75 // pred_check_branch
          %2170 = sbr.rel (%p2168) target = $region84
        $region83: #{cross_attention_layer_bld.1} parent=75 // pred_region
          %s2172 = ssub.s32 128, 128
          %2173 = vsyncadd %s2164, %s2172
          %s2174 = sadd.s32 %s33, %s32
          %s2175 = smul.addr %s2174, 128
          %s2176 = scalar_lea.hbm %s14, %s2175
          %s2178 = sshll.u32 %s2167, 4
          %s2179 = int_to_ptr.vmem [resolvable:$true] %s2178
          %2181 = dma.vmem_to_hbm [thread:$0]  %s2179, 128, %s2176, %s2164
        $region84: #{cross_attention_layer_bld.1} parent=75 // pred_fallthru
          _
      $region76: #{cross_attention_layer_bld.1} parent=5 // pred_fallthru
        _
      %p2182 = scmp.le.s32.totalorder 2, %s23
      // Predicated region
      $region85: #{cross_attention_layer_bld.1} parent=5 // pred_check
        %p2183 = pneg %p2182
      $region86: #{cross_attention_layer_bld.1} parent=5 // pred_check_branch
        %2185 = sbr.rel (%p2183) target = $region88
      $region87: #{cross_attention_layer_bld.1} parent=5 // pred_region
        %s2186 = ssub.s32 %s23, 2
        // Predicated region
        $region89: #{cross_attention_layer_bld.1} parent=87 // pred_check
          %p2187 = pneg %p384
        $region90: #{cross_attention_layer_bld.1} parent=87 // pred_check_branch
          %2189 = sbr.rel (%p2187) target = $region92
        $region91: #{cross_attention_layer_bld.1} parent=87 // pred_region
          %s2190 = sand.u32 %s369, 1
          %s2191 = scalar_lea.sflag [#allocation5], %s2190
          %s2192 = sand.u32 %s369, 1
          %s2193 = smul.addr %s2192, 8
          %s2194 = scalar_lea.vmem [#allocation4], %s2193
          %2195 = dma.done %s2191, 128
        $region92: #{cross_attention_layer_bld.1} parent=87 // pred_fallthru
          _
      $region88: #{cross_attention_layer_bld.1} parent=5 // pred_fallthru
        _
    $region6: #{cross_attention_layer_bld.1} parent=1 // loop_footer
      %s27 = sadd.s32 1, %s23
    $region7: #{cross_attention_layer_bld.1} parent=1 // loop_footer_branch
      %22 = sbr.rel target = $region3
    $region8: #{cross_attention_layer_bld.1} parent=1 // loop_exit
      _
    %2196 = vsyncpa [#allocation5], 1
    %s2197 = scalar_lea.sflag [#allocation5], 1
    %2198 = vsyncpa %s2197, 1

</llo_original>
